<compile_context>
chip_gen: v5e
topology: v5e:2x2
jax: 0.10.0
libtpu: 0.0.40
codegen_flags: <defaults>
</compile_context>

<pallas_src>
import jax
import jax.numpy as jnp
import numpy as np
from jax import lax
from jax.experimental import pallas as pl
from jax.experimental.pallas import tpu as pltpu

# ---------------------------------------------------------------------------
# Problem sizes (small, consistent with the module: n_q configs, n_v vels,
# n_g collision geometries, n_p collision candidate pairs).
# ---------------------------------------------------------------------------
N_Q = 12                 # configuration dimension
N_V = 16                 # velocity dimension
N_G = 3                  # number of collision geometries (all spheres)
IDX_A = (0, 0, 1)        # collision_candidates[0, :]
IDX_B = (1, 2, 2)        # collision_candidates[1, :]
N_P = len(IDX_A)         # number of candidate pairs (1 contact each)

_HI = jax.lax.Precision.HIGHEST
# Guards only the exactly-coincident-centers case (below f32 eps for O(1)
# distances): the contact frame degenerates there but stays finite (no NaN).
_EPS = 1e-12
_LANE_TILE = 512         # max batch (lane) tile: ~0.9 MB of HBM traffic/step


def _lane_tiling(batch):
    """Batch (lane-axis) tiling policy.

    * batch <= _LANE_TILE: one block spanning the whole lane axis (a block that
      covers the full lane extent is exempt from the multiple-of-128 rule), so
      nothing is padded and single-TC chips (v5e/v6e) pay no extra grid steps.
    * larger batches: pad up to a multiple of a 128-aligned tile so every block
      is lane-dense, per-step HBM traffic (~1.8 KB/elem) amortizes the
      ~0.35 us/step overhead, and the "parallel" grid axis gives both v7x
      TensorCores work; tiles yielding an even step count are preferred (v7x
      shards parallel steps across 2 TCs), then least padding, then larger
      tiles.  Larger tiles trade step-overhead amortization against vreg-spill
      traffic; both sit below the HBM bound at 512 lanes.
    VMEM is never the constraint at these block sizes (<2 MB/step including
    double buffering, far below even v5e's 16 MiB default scoped limit).
    """
    if batch <= _LANE_TILE:
        return batch, batch
    best = None
    for tile in (512, 256, 128):
        steps = -(-batch // tile)
        padded = steps * tile
        key = (steps % 2, padded - batch, -tile)
        if best is None or key < best[0]:
            best = (key, tile, padded)
    return best[1], best[2]


# ---------------------------------------------------------------------------
# Pallas kernel: per-batch-tile contact geometry + contact Jacobian assembly.
# ---------------------------------------------------------------------------
def _make_contact_kernel(idx_a, idx_b, n_g, n_v):
    n_p = len(idx_a)
    nj = 3 * n_p * n_v          # number of J rows in the fused output block

    def kernel(mu_ref, rad_ref, p_ref, jv_ref, out_ref):
        # Layout: batch on the lane (last) axis of every tile.
        #   p_ref   : (n_g*3,     TB)  translations, row g*3+k
        #   jv_ref  : (n_g*6*n_v, TB)  spatial Jacobians, rows (g*6+s)*n_v ..
        #   out_ref : (3*n_p*n_v + n_p, TB)  J rows first (16-row windows,
        #             aligned to the 8-sublane tiling), phi rows appended.
        def prow(g, k):                      # (1, TB) translation component
            return p_ref[pl.ds(g * 3 + k, 1), :]

        def jrow(g, s):                      # (n_v, TB) spatial-Jacobian row
            return jv_ref[pl.ds((g * 6 + s) * n_v, n_v), :].astype(jnp.float32)

        phi_rows = []
        for i in range(n_p):                 # n_p static & tiny: unrolled
            ga, gb = idx_a[i], idx_b[i]
            mu_i = mu_ref[i]
            rad_a = rad_ref[ga]
            rad_b = rad_ref[gb]

            # Sphere-sphere signed distance straight from the world-frame
            # center offset (|p_AoBo_W| == |p_AoBo_A|: the A-frame change of
            # the reference module cancels, so R_WC never enters the kernel).
            pw = [prow(gb, k) - prow(ga, k) for k in range(3)]
            d2 = pw[0] * pw[0] + pw[1] * pw[1] + pw[2] * pw[2] + _EPS
            inv_d = lax.rsqrt(d2)            # EUP op; keeps the VALU slot free
            dist = d2 * inv_d
            phi_rows.append(dist - (rad_a + rad_b))

            nw = [pw[k] * inv_d for k in range(3)]    # world-frame normal

            # Right-handed contact frame with z == normal, built directly in
            # the world frame (Gram-Schmidt on a coordinate helper).
            # TODO(synk): dair_pll's GeometryCollider builds its tangent basis
            # in the A frame; any right-handed frame with z == normal spans the
            # same friction cone, so J_t matches only up to an in-plane
            # rotation (phi and J_n are exact).
            use_x = jnp.abs(nw[0]) < 0.9
            h0 = jnp.where(use_x, 1.0, 0.0)
            h1 = 1.0 - h0
            hdn = h0 * nw[0] + h1 * nw[1]
            t_raw = [h0 - hdn * nw[0], h1 - hdn * nw[1], -hdn * nw[2]]
            t_inv = lax.rsqrt(t_raw[0] * t_raw[0] + t_raw[1] * t_raw[1]
                              + t_raw[2] * t_raw[2])
            t = [t_raw[k] * t_inv for k in range(3)]
            bt = [nw[1] * t[2] - nw[2] * t[1],
                  nw[2] * t[0] - nw[0] * t[2],
                  nw[0] * t[1] - nw[1] * t[0]]
            # Fold mu into the tangent axes here: 6 ops on (1, TB) rows instead
            # of 2*n_v-row multiplies after the projection.
            tm = [mu_i * t[k] for k in range(3)]
            btm = [mu_i * bt[k] for k in range(3)]

            # World-frame witness-point offsets (sphere-sphere): body-frame
            # witness points rotate back to +/- radius * normal, so no rotation
            # matrices are needed inside the kernel at all.
            pa = [rad_a * nw[k] for k in range(3)]
            pb = [-rad_b * nw[k] for k in range(3)]

            # Relative point-velocity Jacobian projected onto the contact
            # frame, accumulated one world component at a time so at most six
            # (n_v, TB) Jacobian rows plus three accumulators are live; the
            # spatial-Jacobian rows are re-read from VMEM per component rather
            # than preloaded (vreg-pressure review note).
            j_n = j_x = j_y = None
            for k in range(3):
                k1, k2 = (k + 1) % 3, (k + 2) % 3
                # rel_k = ([-hat(p_Bc_W), I3] @ Jv_b - [-hat(p_Ac_W), I3] @ Jv_a)_k
                rel_k = (pb[k2] * jrow(gb, k1) - pb[k1] * jrow(gb, k2)
                         + jrow(gb, 3 + k)
                         - (pa[k2] * jrow(ga, k1) - pa[k1] * jrow(ga, k2)
                            + jrow(ga, 3 + k)))
                if k == 0:
                    j_n, j_x, j_y = nw[k] * rel_k, tm[k] * rel_k, btm[k] * rel_k
                else:
                    j_n = j_n + nw[k] * rel_k
                    j_x = j_x + tm[k] * rel_k
                    j_y = j_y + btm[k] * rel_k

            # [J_n; mu * J_t] row ordering, written as full-lane-width,
            # 16-sublane-aligned windows of the fused output block.
            out_ref[pl.ds(i * n_v, n_v), :] = j_n
            out_ref[pl.ds((n_p + 2 * i) * n_v, n_v), :] = j_x
            out_ref[pl.ds((n_p + 2 * i + 1) * n_v, n_v), :] = j_y

        # Single phi store (n_p rows) appended after the J rows.
        out_ref[pl.ds(nj, n_p), :] = jnp.concatenate(phi_rows, axis=0)

    return kernel


# ---------------------------------------------------------------------------
# Wrapper: lane-major kinematics in, lane-major phi/J out; padding + grid.
# ---------------------------------------------------------------------------
def contact_terms_pallas_t(p_t, jv_t, friction_params, radii, idx_a, idx_b,
                           *, jv_dtype=jnp.float32):
    """phi(q), J(q) for sphere-sphere candidate pairs (ContactTerms.forward).

    Lane-major interface (batch last):
      p_t  : (n_g*3, B)       geometry translations p_WoCo_W
      jv_t : (n_g*6*n_v, B)   geometry spatial Jacobians Jv_V_WC_W
    Returns phi_t (n_p, B) and j_t (3*n_p*n_v, B) in [J_n; mu*J_t] row order.
    """
    n_g3, B = p_t.shape
    n_g = n_g3 // 3
    n_v = jv_t.shape[0] // (n_g * 6)
    n_p = len(idx_a)
    ia = jnp.asarray(idx_a)
    ib = jnp.asarray(idx_b)

    # get_friction_coefficients() + pairwise combination (guarded division).
    mu_g = jnp.abs(friction_params).astype(jnp.float32)
    mu_a, mu_b = mu_g[ia], mu_g[ib]
    denom = mu_a + mu_b
    mu = jnp.where(denom > 0, 2.0 * mu_a * mu_b / jnp.maximum(denom, _EPS), 0.0)

    p_t = p_t.astype(jnp.float32)
    # TODO(synk): jv_dtype=jnp.bfloat16 cuts the dominant HBM read stream ~2x
    # once the kernel is lane-dense (J is linear in Jv, ~1e-3 relative error);
    # default stays float32 to hold the 1e-4 verification tolerance.
    jv_t = jv_t.astype(jv_dtype)

    tb, padded = _lane_tiling(B)
    if padded != B:
        # Zero-padded columns stay finite in the kernel (eps-guarded rsqrt)
        # and are sliced off below; this replaces the previous full-array
        # fallback that could blow scoped VMEM for large ragged batches.
        p_t = jnp.pad(p_t, ((0, 0), (0, padded - B)))
        jv_t = jnp.pad(jv_t, ((0, 0), (0, padded - B)))
    grid = (padded // tb,)

    n_out = 3 * n_p * n_v + n_p
    smem = pl.BlockSpec(memory_space=pltpu.MemorySpace.SMEM)
    kernel = _make_contact_kernel(tuple(idx_a), tuple(idx_b), n_g, n_v)

    out = pl.pallas_call(
        kernel,
        out_shape=jax.ShapeDtypeStruct((n_out, padded), jnp.float32),
        grid=grid,
        in_specs=[
            smem,                                                 # mu    (n_p,)
            smem,                                                 # radii (n_g,)
            pl.BlockSpec((n_g * 3, tb), lambda b: (0, b)),        # p_t
            pl.BlockSpec((n_g * 6 * n_v, tb), lambda b: (0, b)),  # jv_t
        ],
        out_specs=pl.BlockSpec((n_out, tb), lambda b: (0, b)),
        compiler_params=pltpu.CompilerParams(
            dimension_semantics=("parallel",)),
    )(mu, radii.astype(jnp.float32), p_t, jv_t)

    out = out[:, :B]
    j_t = out[:3 * n_p * n_v]     # (3*n_p*n_v, B), [J_n; mu*J_t] row order
    phi_t = out[3 * n_p * n_v:]   # (n_p, B)
    return phi_t, j_t


def contact_terms_to_module_layout(phi_t, j_t, n_v):
    """Lane-major kernel outputs -> module layout (B, n_p) / (B, 3*n_p, n_v).

    The only wrapper-side data movement is this small output transpose
    (~0.6 KB per batch element); the kinematics inputs are produced lane-major
    upstream, so there is no input-side transpose at all.  Consumers that can
    accept the lane-major layout should use contact_terms_pallas_t directly.
    """
    B = phi_t.shape[1]
    phi = phi_t.T
    J = jnp.transpose(j_t.reshape(-1, n_v, B), (2, 0, 1))
    return phi, J


# ---------------------------------------------------------------------------
# Synthetic deterministic "configuration callbacks" (plain-JAX glue standing
# in for the Drake symbolic expressions compiled by make_configuration_callback).
# The kernel-path callbacks emit the lane-major (feature, B) layout directly
# from the einsums, so the transposed layout is free (no extra HBM round trip).
# ---------------------------------------------------------------------------
def _rodrigues(axis_angle):
    theta = jnp.sqrt(jnp.sum(axis_angle * axis_angle, axis=-1, keepdims=True)
                     + 1e-12)
    k = axis_angle / theta
    kx, ky, kz = k[..., 0], k[..., 1], k[..., 2]
    zero = jnp.zeros_like(kx)
    K = jnp.stack([jnp.stack([zero, -kz, ky], -1),
                   jnp.stack([kz, zero, -kx], -1),
                   jnp.stack([-ky, kx, zero], -1)], -2)
    s = jnp.sin(theta)[..., None]
    c = jnp.cos(theta)[..., None]
    return jnp.eye(3, dtype=axis_angle.dtype) + s * K + (1.0 - c) * (K @ K)


def init_params(key):
    k_rot, k_tr, k_j0, k_j1 = jax.random.split(key, 4)
    return dict(
        W_rot=0.3 * jax.random.normal(k_rot, (N_G, 3, N_Q), jnp.float32),
        W_tr=0.05 * jax.random.normal(k_tr, (N_G, 3, N_Q), jnp.float32),
        base_tr=jnp.array([[0., 0., 0.], [1., 0., 0.], [0., 1., 0.]],
                          jnp.float32),
        J0=jax.random.normal(k_j0, (N_G, 6, N_V), jnp.float32),
        W_J=0.1 * jax.random.normal(k_j1, (N_G, N_Q, 6, N_V), jnp.float32),
        friction_params=jnp.array([0.5, -0.8, 1.2], jnp.float32),  # Parameter
        radii=jnp.array([0.1, 0.2, 0.15], jnp.float32),            # sphere radii
    )


def geometry_rotations(q, p):            # R_WC : (B, n_g, 3, 3), reference path
    return _rodrigues(jnp.einsum('gij,bj->bgi', p['W_rot'], q))


def geometry_translations_t(q, p):       # p_WoCo_W, lane-major: (n_g*3, B)
    out = p['base_tr'][..., None] + jnp.einsum('gij,bj->gib', p['W_tr'], q)
    return out.reshape(N_G * 3, -1)


def geometry_spatial_jacobians_t(q, p):  # Jv_V_WC_W, lane-major: (n_g*6*n_v, B)
    out = p['J0'][..., None] + jnp.einsum('gqsv,bq->gsvb', p['W_J'], q)
    return out.reshape(N_G * 6 * N_V, -1)


def contact_terms_forward(q, params):
    """Module-equivalent forward: q -> (phi (B, n_p), J (B, 3*n_p, n_v))."""
    # TODO(synk): R_WC (geometry_rotations) feeds the general GeometryCollider
    # dispatch in dair_pll; for the sphere-sphere specialization it cancels
    # algebraically from both phi and J (witness points / normal are radial),
    # so it is not evaluated on the kernel path.  The pure-JAX reference below
    # keeps the full rotation math and is used to verify this simplification.
    p_t = geometry_translations_t(q, params)
    jv_t = geometry_spatial_jacobians_t(q, params)
    phi_t, j_t = contact_terms_pallas_t(p_t, jv_t, params['friction_params'],
                                        params['radii'], IDX_A, IDX_B)
    return contact_terms_to_module_layout(phi_t, j_t, N_V)


# ---------------------------------------------------------------------------
# Pure-JAX reference following the original module structure (full rotation /
# frame-change math, GeometryCollider-style sphere-sphere collide), used to
# verify the kernel's world-frame algebraic simplification.
# ---------------------------------------------------------------------------
def contact_terms_reference(R_WC, p_W, Jv, friction_params, radii,
                            idx_a, idx_b):
    ia = jnp.asarray(idx_a)
    ib = jnp.asarray(idx_b)
    B = R_WC.shape[0]
    P = ia.shape[0]
    n_v = Jv.shape[-1]
    mu_g = jnp.abs(friction_params)
    denom = mu_g[ia] + mu_g[ib]
    mu = jnp.where(denom > 0,
                   2.0 * mu_g[ia] * mu_g[ib] / jnp.maximum(denom, _EPS), 0.0)
    ra = radii[ia]
    rb = radii[ib]

    R_WA, R_WB = R_WC[:, ia], R_WC[:, ib]
    Ja, Jb = Jv[:, ia], Jv[:, ib]
    p_AoBo_W = p_W[:, ib] - p_W[:, ia]
    p_AoBo_A = jnp.einsum('bpk,bpkj->bpj', p_AoBo_W, R_WA, precision=_HI)
    dist = jnp.sqrt(jnp.sum(p_AoBo_A * p_AoBo_A, -1) + _EPS)
    phi = dist - (ra + rb)[None]
    n_A = p_AoBo_A / dist[..., None]
    n_W = p_AoBo_W / dist[..., None]

    # Contact frame (z == normal); tangent built from a world-frame helper to
    # match the kernel's (arbitrary but consistent) basis, then expressed in
    # the A frame as GeometryCollider would return it.
    use_x = jnp.abs(n_W[..., 0:1]) < 0.9
    helper = jnp.where(use_x, jnp.array([1., 0., 0.]), jnp.array([0., 1., 0.]))
    t_W = helper - jnp.sum(helper * n_W, -1, keepdims=True) * n_W
    t_W = t_W / jnp.linalg.norm(t_W, axis=-1, keepdims=True)
    b_W = jnp.cross(n_W, t_W)
    t_A = jnp.einsum('bpk,bpkj->bpj', t_W, R_WA, precision=_HI)
    b_A = jnp.einsum('bpk,bpkj->bpj', b_W, R_WA, precision=_HI)
    R_AF = jnp.stack([t_A, b_A, n_A], axis=-1)

    R_AB = jnp.einsum('bpmj,bpmk->bpjk', R_WA, R_WB, precision=_HI)
    n_B = jnp.einsum('bpjk,bpj->bpk', R_AB, n_A, precision=_HI)
    p_Ac_A = ra[None, :, None] * n_A
    p_Bc_B = -rb[None, :, None] * n_B
    R_AW = jnp.swapaxes(R_WA, -1, -2)
    R_BW = jnp.swapaxes(R_WB, -1, -2)
    R_FW = jnp.einsum('bpmj,bpmk->bpjk', R_AF, R_AW, precision=_HI)

    def assemble(R_CW, Jc, p_C):
        p_Wc = jnp.einsum('bpk,bpkj->bpj', p_C, R_CW, precision=_HI)
        px, py, pz = p_Wc[..., 0], p_Wc[..., 1], p_Wc[..., 2]
        zero = jnp.zeros_like(px)
        mhat = jnp.stack([jnp.stack([zero, pz, -py], -1),
                          jnp.stack([-pz, zero, px], -1),
                          jnp.stack([py, -px, zero], -1)], -2)
        spj = jnp.concatenate(
            [mhat, jnp.broadcast_to(jnp.eye(3), mhat.shape)], -1)
        return jnp.einsum('bpjs,bpsv->bpjv', spj, Jc, precision=_HI)

    JvA = assemble(R_AW, Ja, p_Ac_A)
    JvB = assemble(R_BW, Jb, p_Bc_B)
    JvF = jnp.einsum('bpjk,bpkv->bpjv', R_FW, JvB - JvA, precision=_HI)

    J_n = JvF[:, :, 2, :]
    J_t = (mu[None, :, None]
           * jnp.concatenate([JvF[:, :, 0, :], JvF[:, :, 1, :]], -1)
           ).reshape(B, 2 * P, n_v)
    J = jnp.concatenate([J_n, J_t], axis=-2)
    return phi, J


def _module_layout_kinematics(q, params):
    """Transpose the lane-major synthetic kinematics back to module layout
    (test-harness only, so both paths see identical values)."""
    B = q.shape[0]
    p_t = geometry_translations_t(q, params)
    jv_t = geometry_spatial_jacobians_t(q, params)
    p_W = jnp.transpose(p_t.reshape(N_G, 3, B), (2, 0, 1))
    Jv = jnp.transpose(jv_t.reshape(N_G, 6, N_V, B), (3, 0, 1, 2))
    return p_W, Jv


# ---------------------------------------------------------------------------
if __name__ == "__main__":
    key = jax.random.PRNGKey(0)
    k_q, k_p = jax.random.split(key)
    params = init_params(k_p)

    # Small module-consistent demo shapes (single full-lane-extent block).
    B = 16
    q = jax.random.normal(k_q, (B, N_Q), jnp.float32)

    phi, J = jax.jit(contact_terms_forward)(q, params)
    jax.block_until_ready((phi, J))
    assert phi.shape == (B, N_P)
    assert J.shape == (B, 3 * N_P, N_V)

    # Verify the Pallas kernel against the full-rotation-path reference on
    # identical kinematics inputs.
    R_WC = geometry_rotations(q, params)
    p_W, Jv = _module_layout_kinematics(q, params)
    phi_r, J_r = contact_terms_reference(R_WC, p_W, Jv,
                                         params['friction_params'],
                                         params['radii'], IDX_A, IDX_B)
    np.testing.assert_allclose(np.asarray(phi), np.asarray(phi_r),
                               rtol=1e-4, atol=1e-4)
    np.testing.assert_allclose(np.asarray(J), np.asarray(J_r),
                               rtol=1e-4, atol=1e-4)

    # Exercise the padded / lane-tiled path: B=700 -> tile 512, padded to
    # 1024, 2 "parallel" grid steps (shardable across v7x's TensorCores).
    B2 = 700
    q2 = jax.random.normal(jax.random.PRNGKey(1), (B2, N_Q), jnp.float32)
    phi2, J2 = jax.jit(contact_terms_forward)(q2, params)
    jax.block_until_ready((phi2, J2))
    assert phi2.shape == (B2, N_P) and J2.shape == (B2, 3 * N_P, N_V)
    R_WC2 = geometry_rotations(q2, params)
    p_W2, Jv2 = _module_layout_kinematics(q2, params)
    phi2_r, J2_r = contact_terms_reference(R_WC2, p_W2, Jv2,
                                           params['friction_params'],
                                           params['radii'], IDX_A, IDX_B)
    np.testing.assert_allclose(np.asarray(phi2), np.asarray(phi2_r),
                               rtol=1e-4, atol=1e-4)
    np.testing.assert_allclose(np.asarray(J2), np.asarray(J2_r),
                               rtol=1e-4, atol=1e-4)

    print("KERNEL_OK")
</pallas_src>

<mosaic_0001>
module attributes {stable_mosaic.version = 11 : i64} {
  func.func @kernel(%arg0: i32, %arg1: memref<3xf32, #tpu.memory_space<smem>>, %arg2: memref<3xf32, #tpu.memory_space<smem>>, %arg3: memref<9x16xf32, #tpu.memory_space<vmem>>, %arg4: memref<288x16xf32, #tpu.memory_space<vmem>>, %arg5: memref<147x16xf32, #tpu.memory_space<vmem>>) attributes {dimension_semantics = [#tpu.dimension_semantics<parallel>], iteration_bounds = array<i64: 1>, scalar_prefetch = 0 : i64, scratch_operands = 0 : i64, tpu.core_type = #tpu.core_type<tc>, window_params = [{transform_indices = @transform_0, window_bounds = array<i64: 3>}, {transform_indices = @transform_1, window_bounds = array<i64: 3>}, {transform_indices = @transform_2, window_bounds = array<i64: 9, 16>}, {transform_indices = @transform_3, window_bounds = array<i64: 288, 16>}, {transform_indices = @transform_4, window_bounds = array<i64: 147, 16>}]} {
    %c0 = arith.constant 0 : index
    %0 = memref.load %arg1[%c0] : memref<3xf32, #tpu.memory_space<smem>>
    %c0_0 = arith.constant 0 : index
    %1 = memref.load %arg2[%c0_0] : memref<3xf32, #tpu.memory_space<smem>>
    %c1 = arith.constant 1 : index
    %2 = memref.load %arg2[%c1] : memref<3xf32, #tpu.memory_space<smem>>
    %c3 = arith.constant 3 : index
    %c0_1 = arith.constant 0 : index
    %3 = vector.load %arg3[%c3, %c0_1] : memref<9x16xf32, #tpu.memory_space<vmem>>, vector<1x16xf32>
    %c0_2 = arith.constant 0 : index
    %c0_3 = arith.constant 0 : index
    %4 = vector.load %arg3[%c0_2, %c0_3] : memref<9x16xf32, #tpu.memory_space<vmem>>, vector<1x16xf32>
    %5 = arith.subf %3, %4 : vector<1x16xf32>
    %c4 = arith.constant 4 : index
    %c0_4 = arith.constant 0 : index
    %6 = vector.load %arg3[%c4, %c0_4] : memref<9x16xf32, #tpu.memory_space<vmem>>, vector<1x16xf32>
    %c1_5 = arith.constant 1 : index
    %c0_6 = arith.constant 0 : index
    %7 = vector.load %arg3[%c1_5, %c0_6] : memref<9x16xf32, #tpu.memory_space<vmem>>, vector<1x16xf32>
    %8 = arith.subf %6, %7 : vector<1x16xf32>
    %c5 = arith.constant 5 : index
    %c0_7 = arith.constant 0 : index
    %9 = vector.load %arg3[%c5, %c0_7] : memref<9x16xf32, #tpu.memory_space<vmem>>, vector<1x16xf32>
    %c2 = arith.constant 2 : index
    %c0_8 = arith.constant 0 : index
    %10 = vector.load %arg3[%c2, %c0_8] : memref<9x16xf32, #tpu.memory_space<vmem>>, vector<1x16xf32>
    %11 = arith.subf %9, %10 : vector<1x16xf32>
    %12 = arith.mulf %5, %5 : vector<1x16xf32>
    %13 = arith.mulf %8, %8 : vector<1x16xf32>
    %14 = arith.addf %12, %13 : vector<1x16xf32>
    %15 = arith.mulf %11, %11 : vector<1x16xf32>
    %16 = arith.addf %14, %15 : vector<1x16xf32>
    %cst = arith.constant 9.99999996E-13 : f32
    %17 = vector.broadcast %cst : f32 to vector<1x16xf32>
    %18 = arith.addf %16, %17 : vector<1x16xf32>
    %19 = math.rsqrt %18 : vector<1x16xf32>
    %20 = arith.mulf %18, %19 : vector<1x16xf32>
    %21 = arith.addf %1, %2 : f32
    %22 = vector.broadcast %21 : f32 to vector<1x16xf32>
    %23 = arith.subf %20, %22 : vector<1x16xf32>
    %24 = arith.mulf %5, %19 : vector<1x16xf32>
    %25 = arith.mulf %8, %19 : vector<1x16xf32>
    %26 = arith.mulf %11, %19 : vector<1x16xf32>
    %27 = math.absf %24 : vector<1x16xf32>
    %cst_9 = arith.constant 0.899999976 : f32
    %28 = vector.broadcast %cst_9 : f32 to vector<1x16xf32>
    %29 = arith.cmpf olt, %27, %28 : vector<1x16xf32>
    %cst_10 = arith.constant 1.000000e+00 : f32
    %cst_11 = arith.constant 0.000000e+00 : f32
    %30 = vector.broadcast %cst_10 : f32 to vector<1x16xf32>
    %31 = vector.broadcast %cst_11 : f32 to vector<1x16xf32>
    %32 = arith.select %29, %30, %31 : vector<1x16xi1>, vector<1x16xf32>
    %cst_12 = arith.constant 1.000000e+00 : f32
    %33 = vector.broadcast %cst_12 : f32 to vector<1x16xf32>
    %34 = arith.subf %33, %32 : vector<1x16xf32>
    %35 = arith.mulf %32, %24 : vector<1x16xf32>
    %36 = arith.mulf %34, %25 : vector<1x16xf32>
    %37 = arith.addf %35, %36 : vector<1x16xf32>
    %38 = arith.mulf %37, %24 : vector<1x16xf32>
    %39 = arith.subf %32, %38 : vector<1x16xf32>
    %40 = arith.mulf %37, %25 : vector<1x16xf32>
    %41 = arith.subf %34, %40 : vector<1x16xf32>
    %cst_13 = arith.constant 0.000000e+00 : f32
    %42 = vector.broadcast %cst_13 : f32 to vector<1x16xf32>
    %43 = arith.subf %42, %37 : vector<1x16xf32>
    %44 = arith.mulf %43, %26 : vector<1x16xf32>
    %45 = arith.mulf %39, %39 : vector<1x16xf32>
    %46 = arith.mulf %41, %41 : vector<1x16xf32>
    %47 = arith.addf %45, %46 : vector<1x16xf32>
    %48 = arith.mulf %44, %44 : vector<1x16xf32>
    %49 = arith.addf %47, %48 : vector<1x16xf32>
    %50 = math.rsqrt %49 : vector<1x16xf32>
    %51 = arith.mulf %39, %50 : vector<1x16xf32>
    %52 = arith.mulf %41, %50 : vector<1x16xf32>
    %53 = arith.mulf %44, %50 : vector<1x16xf32>
    %54 = arith.mulf %25, %53 : vector<1x16xf32>
    %55 = arith.mulf %26, %52 : vector<1x16xf32>
    %56 = arith.subf %54, %55 : vector<1x16xf32>
    %57 = arith.mulf %26, %51 : vector<1x16xf32>
    %58 = arith.mulf %24, %53 : vector<1x16xf32>
    %59 = arith.subf %57, %58 : vector<1x16xf32>
    %60 = arith.mulf %24, %52 : vector<1x16xf32>
    %61 = arith.mulf %25, %51 : vector<1x16xf32>
    %62 = arith.subf %60, %61 : vector<1x16xf32>
    %63 = vector.broadcast %0 : f32 to vector<1x16xf32>
    %64 = arith.mulf %63, %51 : vector<1x16xf32>
    %65 = vector.broadcast %0 : f32 to vector<1x16xf32>
    %66 = arith.mulf %65, %52 : vector<1x16xf32>
    %67 = vector.broadcast %0 : f32 to vector<1x16xf32>
    %68 = arith.mulf %67, %53 : vector<1x16xf32>
    %69 = vector.broadcast %0 : f32 to vector<1x16xf32>
    %70 = arith.mulf %69, %56 : vector<1x16xf32>
    %71 = vector.broadcast %0 : f32 to vector<1x16xf32>
    %72 = arith.mulf %71, %59 : vector<1x16xf32>
    %73 = vector.broadcast %0 : f32 to vector<1x16xf32>
    %74 = arith.mulf %73, %62 : vector<1x16xf32>
    %75 = vector.broadcast %1 : f32 to vector<1x16xf32>
    %76 = arith.mulf %75, %24 : vector<1x16xf32>
    %77 = vector.broadcast %1 : f32 to vector<1x16xf32>
    %78 = arith.mulf %77, %25 : vector<1x16xf32>
    %79 = vector.broadcast %1 : f32 to vector<1x16xf32>
    %80 = arith.mulf %79, %26 : vector<1x16xf32>
    %cst_14 = arith.constant 0.000000e+00 : f32
    %81 = arith.subf %cst_14, %2 : f32
    %82 = vector.broadcast %81 : f32 to vector<1x16xf32>
    %83 = arith.mulf %82, %24 : vector<1x16xf32>
    %cst_15 = arith.constant 0.000000e+00 : f32
    %84 = arith.subf %cst_15, %2 : f32
    %85 = vector.broadcast %84 : f32 to vector<1x16xf32>
    %86 = arith.mulf %85, %25 : vector<1x16xf32>
    %cst_16 = arith.constant 0.000000e+00 : f32
    %87 = arith.subf %cst_16, %2 : f32
    %88 = vector.broadcast %87 : f32 to vector<1x16xf32>
    %89 = arith.mulf %88, %26 : vector<1x16xf32>
    %c112 = arith.constant 112 : index
    %c0_17 = arith.constant 0 : index
    %90 = vector.load %arg4[%c112, %c0_17] : memref<288x16xf32, #tpu.memory_space<vmem>>, vector<16x16xf32>
    %91 = vector.broadcast %89 : vector<1x16xf32> to vector<16x16xf32>
    %92 = arith.mulf %91, %90 : vector<16x16xf32>
    %c128 = arith.constant 128 : index
    %c0_18 = arith.constant 0 : index
    %93 = vector.load %arg4[%c128, %c0_18] : memref<288x16xf32, #tpu.memory_space<vmem>>, vector<16x16xf32>
    %94 = vector.broadcast %86 : vector<1x16xf32> to vector<16x16xf32>
    %95 = arith.mulf %94, %93 : vector<16x16xf32>
    %96 = arith.subf %92, %95 : vector<16x16xf32>
    %c144 = arith.constant 144 : index
    %c0_19 = arith.constant 0 : index
    %97 = vector.load %arg4[%c144, %c0_19] : memref<288x16xf32, #tpu.memory_space<vmem>>, vector<16x16xf32>
    %98 = arith.addf %96, %97 : vector<16x16xf32>
    %c16 = arith.constant 16 : index
    %c0_20 = arith.constant 0 : index
    %99 = vector.load %arg4[%c16, %c0_20] : memref<288x16xf32, #tpu.memory_space<vmem>>, vector<16x16xf32>
    %100 = vector.broadcast %80 : vector<1x16xf32> to vector<16x16xf32>
    %101 = arith.mulf %100, %99 : vector<16x16xf32>
    %c32 = arith.constant 32 : index
    %c0_21 = arith.constant 0 : index
    %102 = vector.load %arg4[%c32, %c0_21] : memref<288x16xf32, #tpu.memory_space<vmem>>, vector<16x16xf32>
    %103 = vector.broadcast %78 : vector<1x16xf32> to vector<16x16xf32>
    %104 = arith.mulf %103, %102 : vector<16x16xf32>
    %105 = arith.subf %101, %104 : vector<16x16xf32>
    %c48 = arith.constant 48 : index
    %c0_22 = arith.constant 0 : index
    %106 = vector.load %arg4[%c48, %c0_22] : memref<288x16xf32, #tpu.memory_space<vmem>>, vector<16x16xf32>
    %107 = arith.addf %105, %106 : vector<16x16xf32>
    %108 = arith.subf %98, %107 : vector<16x16xf32>
    %109 = vector.broadcast %24 : vector<1x16xf32> to vector<16x16xf32>
    %110 = arith.mulf %109, %108 : vector<16x16xf32>
    %111 = vector.broadcast %64 : vector<1x16xf32> to vector<16x16xf32>
    %112 = arith.mulf %111, %108 : vector<16x16xf32>
    %113 = vector.broadcast %70 : vector<1x16xf32> to vector<16x16xf32>
    %114 = arith.mulf %113, %108 : vector<16x16xf32>
    %c128_23 = arith.constant 128 : index
    %c0_24 = arith.constant 0 : index
    %115 = vector.load %arg4[%c128_23, %c0_24] : memref<288x16xf32, #tpu.memory_space<vmem>>, vector<16x16xf32>
    %116 = vector.broadcast %83 : vector<1x16xf32> to vector<16x16xf32>
    %117 = arith.mulf %116, %115 : vector<16x16xf32>
    %c96 = arith.constant 96 : index
    %c0_25 = arith.constant 0 : index
    %118 = vector.load %arg4[%c96, %c0_25] : memref<288x16xf32, #tpu.memory_space<vmem>>, vector<16x16xf32>
    %119 = vector.broadcast %89 : vector<1x16xf32> to vector<16x16xf32>
    %120 = arith.mulf %119, %118 : vector<16x16xf32>
    %121 = arith.subf %117, %120 : vector<16x16xf32>
    %c160 = arith.constant 160 : index
    %c0_26 = arith.constant 0 : index
    %122 = vector.load %arg4[%c160, %c0_26] : memref<288x16xf32, #tpu.memory_space<vmem>>, vector<16x16xf32>
    %123 = arith.addf %121, %122 : vector<16x16xf32>
    %c32_27 = arith.constant 32 : index
    %c0_28 = arith.constant 0 : index
    %124 = vector.load %arg4[%c32_27, %c0_28] : memref<288x16xf32, #tpu.memory_space<vmem>>, vector<16x16xf32>
    %125 = vector.broadcast %76 : vector<1x16xf32> to vector<16x16xf32>
    %126 = arith.mulf %125, %124 : vector<16x16xf32>
    %c0_29 = arith.constant 0 : index
    %c0_30 = arith.constant 0 : index
    %127 = vector.load %arg4[%c0_29, %c0_30] : memref<288x16xf32, #tpu.memory_space<vmem>>, vector<16x16xf32>
    %128 = vector.broadcast %80 : vector<1x16xf32> to vector<16x16xf32>
    %129 = arith.mulf %128, %127 : vector<16x16xf32>
    %130 = arith.subf %126, %129 : vector<16x16xf32>
    %c64 = arith.constant 64 : index
    %c0_31 = arith.constant 0 : index
    %131 = vector.load %arg4[%c64, %c0_31] : memref<288x16xf32, #tpu.memory_space<vmem>>, vector<16x16xf32>
    %132 = arith.addf %130, %131 : vector<16x16xf32>
    %133 = arith.subf %123, %132 : vector<16x16xf32>
    %134 = vector.broadcast %25 : vector<1x16xf32> to vector<16x16xf32>
    %135 = arith.mulf %134, %133 : vector<16x16xf32>
    %136 = arith.addf %110, %135 : vector<16x16xf32>
    %137 = vector.broadcast %66 : vector<1x16xf32> to vector<16x16xf32>
    %138 = arith.mulf %137, %133 : vector<16x16xf32>
    %139 = arith.addf %112, %138 : vector<16x16xf32>
    %140 = vector.broadcast %72 : vector<1x16xf32> to vector<16x16xf32>
    %141 = arith.mulf %140, %133 : vector<16x16xf32>
    %142 = arith.addf %114, %141 : vector<16x16xf32>
    %c96_32 = arith.constant 96 : index
    %c0_33 = arith.constant 0 : index
    %143 = vector.load %arg4[%c96_32, %c0_33] : memref<288x16xf32, #tpu.memory_space<vmem>>, vector<16x16xf32>
    %144 = vector.broadcast %86 : vector<1x16xf32> to vector<16x16xf32>
    %145 = arith.mulf %144, %143 : vector<16x16xf32>
    %c112_34 = arith.constant 112 : index
    %c0_35 = arith.constant 0 : index
    %146 = vector.load %arg4[%c112_34, %c0_35] : memref<288x16xf32, #tpu.memory_space<vmem>>, vector<16x16xf32>
    %147 = vector.broadcast %83 : vector<1x16xf32> to vector<16x16xf32>
    %148 = arith.mulf %147, %146 : vector<16x16xf32>
    %149 = arith.subf %145, %148 : vector<16x16xf32>
    %c176 = arith.constant 176 : index
    %c0_36 = arith.constant 0 : index
    %150 = vector.load %arg4[%c176, %c0_36] : memref<288x16xf32, #tpu.memory_space<vmem>>, vector<16x16xf32>
    %151 = arith.addf %149, %150 : vector<16x16xf32>
    %c0_37 = arith.constant 0 : index
    %c0_38 = arith.constant 0 : index
    %152 = vector.load %arg4[%c0_37, %c0_38] : memref<288x16xf32, #tpu.memory_space<vmem>>, vector<16x16xf32>
    %153 = vector.broadcast %78 : vector<1x16xf32> to vector<16x16xf32>
    %154 = arith.mulf %153, %152 : vector<16x16xf32>
    %c16_39 = arith.constant 16 : index
    %c0_40 = arith.constant 0 : index
    %155 = vector.load %arg4[%c16_39, %c0_40] : memref<288x16xf32, #tpu.memory_space<vmem>>, vector<16x16xf32>
    %156 = vector.broadcast %76 : vector<1x16xf32> to vector<16x16xf32>
    %157 = arith.mulf %156, %155 : vector<16x16xf32>
    %158 = arith.subf %154, %157 : vector<16x16xf32>
    %c80 = arith.constant 80 : index
    %c0_41 = arith.constant 0 : index
    %159 = vector.load %arg4[%c80, %c0_41] : memref<288x16xf32, #tpu.memory_space<vmem>>, vector<16x16xf32>
    %160 = arith.addf %158, %159 : vector<16x16xf32>
    %161 = arith.subf %151, %160 : vector<16x16xf32>
    %162 = vector.broadcast %26 : vector<1x16xf32> to vector<16x16xf32>
    %163 = arith.mulf %162, %161 : vector<16x16xf32>
    %164 = arith.addf %136, %163 : vector<16x16xf32>
    %165 = vector.broadcast %68 : vector<1x16xf32> to vector<16x16xf32>
    %166 = arith.mulf %165, %161 : vector<16x16xf32>
    %167 = arith.addf %139, %166 : vector<16x16xf32>
    %168 = vector.broadcast %74 : vector<1x16xf32> to vector<16x16xf32>
    %169 = arith.mulf %168, %161 : vector<16x16xf32>
    %170 = arith.addf %142, %169 : vector<16x16xf32>
    %c0_42 = arith.constant 0 : index
    %c0_43 = arith.constant 0 : index
    %171 = vector.load %arg5[%c0_42, %c0_43] : memref<147x16xf32, #tpu.memory_space<vmem>>, vector<16x16xf32>
    tpu.vector_store %arg5[%c0_42, %c0_43], %164 {strides = array<i32>} : memref<147x16xf32, #tpu.memory_space<vmem>>, vector<16x16xf32>,
    %c48_44 = arith.constant 48 : index
    %c0_45 = arith.constant 0 : index
    %172 = vector.load %arg5[%c48_44, %c0_45] : memref<147x16xf32, #tpu.memory_space<vmem>>, vector<16x16xf32>
    tpu.vector_store %arg5[%c48_44, %c0_45], %167 {strides = array<i32>} : memref<147x16xf32, #tpu.memory_space<vmem>>, vector<16x16xf32>,
    %c64_46 = arith.constant 64 : index
    %c0_47 = arith.constant 0 : index
    %173 = vector.load %arg5[%c64_46, %c0_47] : memref<147x16xf32, #tpu.memory_space<vmem>>, vector<16x16xf32>
    tpu.vector_store %arg5[%c64_46, %c0_47], %170 {strides = array<i32>} : memref<147x16xf32, #tpu.memory_space<vmem>>, vector<16x16xf32>,
    %c1_48 = arith.constant 1 : index
    %174 = memref.load %arg1[%c1_48] : memref<3xf32, #tpu.memory_space<smem>>
    %c0_49 = arith.constant 0 : index
    %175 = memref.load %arg2[%c0_49] : memref<3xf32, #tpu.memory_space<smem>>
    %c2_50 = arith.constant 2 : index
    %176 = memref.load %arg2[%c2_50] : memref<3xf32, #tpu.memory_space<smem>>
    %c6 = arith.constant 6 : index
    %c0_51 = arith.constant 0 : index
    %177 = vector.load %arg3[%c6, %c0_51] : memref<9x16xf32, #tpu.memory_space<vmem>>, vector<1x16xf32>
    %c0_52 = arith.constant 0 : index
    %c0_53 = arith.constant 0 : index
    %178 = vector.load %arg3[%c0_52, %c0_53] : memref<9x16xf32, #tpu.memory_space<vmem>>, vector<1x16xf32>
    %179 = arith.subf %177, %178 : vector<1x16xf32>
    %c7 = arith.constant 7 : index
    %c0_54 = arith.constant 0 : index
    %180 = vector.load %arg3[%c7, %c0_54] : memref<9x16xf32, #tpu.memory_space<vmem>>, vector<1x16xf32>
    %c1_55 = arith.constant 1 : index
    %c0_56 = arith.constant 0 : index
    %181 = vector.load %arg3[%c1_55, %c0_56] : memref<9x16xf32, #tpu.memory_space<vmem>>, vector<1x16xf32>
    %182 = arith.subf %180, %181 : vector<1x16xf32>
    %c8 = arith.constant 8 : index
    %c0_57 = arith.constant 0 : index
    %183 = vector.load %arg3[%c8, %c0_57] : memref<9x16xf32, #tpu.memory_space<vmem>>, vector<1x16xf32>
    %c2_58 = arith.constant 2 : index
    %c0_59 = arith.constant 0 : index
    %184 = vector.load %arg3[%c2_58, %c0_59] : memref<9x16xf32, #tpu.memory_space<vmem>>, vector<1x16xf32>
    %185 = arith.subf %183, %184 : vector<1x16xf32>
    %186 = arith.mulf %179, %179 : vector<1x16xf32>
    %187 = arith.mulf %182, %182 : vector<1x16xf32>
    %188 = arith.addf %186, %187 : vector<1x16xf32>
    %189 = arith.mulf %185, %185 : vector<1x16xf32>
    %190 = arith.addf %188, %189 : vector<1x16xf32>
    %cst_60 = arith.constant 9.99999996E-13 : f32
    %191 = vector.broadcast %cst_60 : f32 to vector<1x16xf32>
    %192 = arith.addf %190, %191 : vector<1x16xf32>
    %193 = math.rsqrt %192 : vector<1x16xf32>
    %194 = arith.mulf %192, %193 : vector<1x16xf32>
    %195 = arith.addf %175, %176 : f32
    %196 = vector.broadcast %195 : f32 to vector<1x16xf32>
    %197 = arith.subf %194, %196 : vector<1x16xf32>
    %198 = arith.mulf %179, %193 : vector<1x16xf32>
    %199 = arith.mulf %182, %193 : vector<1x16xf32>
    %200 = arith.mulf %185, %193 : vector<1x16xf32>
    %201 = math.absf %198 : vector<1x16xf32>
    %cst_61 = arith.constant 0.899999976 : f32
    %202 = vector.broadcast %cst_61 : f32 to vector<1x16xf32>
    %203 = arith.cmpf olt, %201, %202 : vector<1x16xf32>
    %cst_62 = arith.constant 1.000000e+00 : f32
    %cst_63 = arith.constant 0.000000e+00 : f32
    %204 = vector.broadcast %cst_62 : f32 to vector<1x16xf32>
    %205 = vector.broadcast %cst_63 : f32 to vector<1x16xf32>
    %206 = arith.select %203, %204, %205 : vector<1x16xi1>, vector<1x16xf32>
    %cst_64 = arith.constant 1.000000e+00 : f32
    %207 = vector.broadcast %cst_64 : f32 to vector<1x16xf32>
    %208 = arith.subf %207, %206 : vector<1x16xf32>
    %209 = arith.mulf %206, %198 : vector<1x16xf32>
    %210 = arith.mulf %208, %199 : vector<1x16xf32>
    %211 = arith.addf %209, %210 : vector<1x16xf32>
    %212 = arith.mulf %211, %198 : vector<1x16xf32>
    %213 = arith.subf %206, %212 : vector<1x16xf32>
    %214 = arith.mulf %211, %199 : vector<1x16xf32>
    %215 = arith.subf %208, %214 : vector<1x16xf32>
    %cst_65 = arith.constant 0.000000e+00 : f32
    %216 = vector.broadcast %cst_65 : f32 to vector<1x16xf32>
    %217 = arith.subf %216, %211 : vector<1x16xf32>
    %218 = arith.mulf %217, %200 : vector<1x16xf32>
    %219 = arith.mulf %213, %213 : vector<1x16xf32>
    %220 = arith.mulf %215, %215 : vector<1x16xf32>
    %221 = arith.addf %219, %220 : vector<1x16xf32>
    %222 = arith.mulf %218, %218 : vector<1x16xf32>
    %223 = arith.addf %221, %222 : vector<1x16xf32>
    %224 = math.rsqrt %223 : vector<1x16xf32>
    %225 = arith.mulf %213, %224 : vector<1x16xf32>
    %226 = arith.mulf %215, %224 : vector<1x16xf32>
    %227 = arith.mulf %218, %224 : vector<1x16xf32>
    %228 = arith.mulf %199, %227 : vector<1x16xf32>
    %229 = arith.mulf %200, %226 : vector<1x16xf32>
    %230 = arith.subf %228, %229 : vector<1x16xf32>
    %231 = arith.mulf %200, %225 : vector<1x16xf32>
    %232 = arith.mulf %198, %227 : vector<1x16xf32>
    %233 = arith.subf %231, %232 : vector<1x16xf32>
    %234 = arith.mulf %198, %226 : vector<1x16xf32>
    %235 = arith.mulf %199, %225 : vector<1x16xf32>
    %236 = arith.subf %234, %235 : vector<1x16xf32>
    %237 = vector.broadcast %174 : f32 to vector<1x16xf32>
    %238 = arith.mulf %237, %225 : vector<1x16xf32>
    %239 = vector.broadcast %174 : f32 to vector<1x16xf32>
    %240 = arith.mulf %239, %226 : vector<1x16xf32>
    %241 = vector.broadcast %174 : f32 to vector<1x16xf32>
    %242 = arith.mulf %241, %227 : vector<1x16xf32>
    %243 = vector.broadcast %174 : f32 to vector<1x16xf32>
    %244 = arith.mulf %243, %230 : vector<1x16xf32>
    %245 = vector.broadcast %174 : f32 to vector<1x16xf32>
    %246 = arith.mulf %245, %233 : vector<1x16xf32>
    %247 = vector.broadcast %174 : f32 to vector<1x16xf32>
    %248 = arith.mulf %247, %236 : vector<1x16xf32>
    %249 = vector.broadcast %175 : f32 to vector<1x16xf32>
    %250 = arith.mulf %249, %198 : vector<1x16xf32>
    %251 = vector.broadcast %175 : f32 to vector<1x16xf32>
    %252 = arith.mulf %251, %199 : vector<1x16xf32>
    %253 = vector.broadcast %175 : f32 to vector<1x16xf32>
    %254 = arith.mulf %253, %200 : vector<1x16xf32>
    %cst_66 = arith.constant 0.000000e+00 : f32
    %255 = arith.subf %cst_66, %176 : f32
    %256 = vector.broadcast %255 : f32 to vector<1x16xf32>
    %257 = arith.mulf %256, %198 : vector<1x16xf32>
    %cst_67 = arith.constant 0.000000e+00 : f32
    %258 = arith.subf %cst_67, %176 : f32
    %259 = vector.broadcast %258 : f32 to vector<1x16xf32>
    %260 = arith.mulf %259, %199 : vector<1x16xf32>
    %cst_68 = arith.constant 0.000000e+00 : f32
    %261 = arith.subf %cst_68, %176 : f32
    %262 = vector.broadcast %261 : f32 to vector<1x16xf32>
    %263 = arith.mulf %262, %200 : vector<1x16xf32>
    %c208 = arith.constant 208 : index
    %c0_69 = arith.constant 0 : index
    %264 = vector.load %arg4[%c208, %c0_69] : memref<288x16xf32, #tpu.memory_space<vmem>>, vector<16x16xf32>
    %265 = vector.broadcast %263 : vector<1x16xf32> to vector<16x16xf32>
    %266 = arith.mulf %265, %264 : vector<16x16xf32>
    %c224 = arith.constant 224 : index
    %c0_70 = arith.constant 0 : index
    %267 = vector.load %arg4[%c224, %c0_70] : memref<288x16xf32, #tpu.memory_space<vmem>>, vector<16x16xf32>
    %268 = vector.broadcast %260 : vector<1x16xf32> to vector<16x16xf32>
    %269 = arith.mulf %268, %267 : vector<16x16xf32>
    %270 = arith.subf %266, %269 : vector<16x16xf32>
    %c240 = arith.constant 240 : index
    %c0_71 = arith.constant 0 : index
    %271 = vector.load %arg4[%c240, %c0_71] : memref<288x16xf32, #tpu.memory_space<vmem>>, vector<16x16xf32>
    %272 = arith.addf %270, %271 : vector<16x16xf32>
    %c16_72 = arith.constant 16 : index
    %c0_73 = arith.constant 0 : index
    %273 = vector.load %arg4[%c16_72, %c0_73] : memref<288x16xf32, #tpu.memory_space<vmem>>, vector<16x16xf32>
    %274 = vector.broadcast %254 : vector<1x16xf32> to vector<16x16xf32>
    %275 = arith.mulf %274, %273 : vector<16x16xf32>
    %c32_74 = arith.constant 32 : index
    %c0_75 = arith.constant 0 : index
    %276 = vector.load %arg4[%c32_74, %c0_75] : memref<288x16xf32, #tpu.memory_space<vmem>>, vector<16x16xf32>
    %277 = vector.broadcast %252 : vector<1x16xf32> to vector<16x16xf32>
    %278 = arith.mulf %277, %276 : vector<16x16xf32>
    %279 = arith.subf %275, %278 : vector<16x16xf32>
    %c48_76 = arith.constant 48 : index
    %c0_77 = arith.constant 0 : index
    %280 = vector.load %arg4[%c48_76, %c0_77] : memref<288x16xf32, #tpu.memory_space<vmem>>, vector<16x16xf32>
    %281 = arith.addf %279, %280 : vector<16x16xf32>
    %282 = arith.subf %272, %281 : vector<16x16xf32>
    %283 = vector.broadcast %198 : vector<1x16xf32> to vector<16x16xf32>
    %284 = arith.mulf %283, %282 : vector<16x16xf32>
    %285 = vector.broadcast %238 : vector<1x16xf32> to vector<16x16xf32>
    %286 = arith.mulf %285, %282 : vector<16x16xf32>
    %287 = vector.broadcast %244 : vector<1x16xf32> to vector<16x16xf32>
    %288 = arith.mulf %287, %282 : vector<16x16xf32>
    %c224_78 = arith.constant 224 : index
    %c0_79 = arith.constant 0 : index
    %289 = vector.load %arg4[%c224_78, %c0_79] : memref<288x16xf32, #tpu.memory_space<vmem>>, vector<16x16xf32>
    %290 = vector.broadcast %257 : vector<1x16xf32> to vector<16x16xf32>
    %291 = arith.mulf %290, %289 : vector<16x16xf32>
    %c192 = arith.constant 192 : index
    %c0_80 = arith.constant 0 : index
    %292 = vector.load %arg4[%c192, %c0_80] : memref<288x16xf32, #tpu.memory_space<vmem>>, vector<16x16xf32>
    %293 = vector.broadcast %263 : vector<1x16xf32> to vector<16x16xf32>
    %294 = arith.mulf %293, %292 : vector<16x16xf32>
    %295 = arith.subf %291, %294 : vector<16x16xf32>
    %c256 = arith.constant 256 : index
    %c0_81 = arith.constant 0 : index
    %296 = vector.load %arg4[%c256, %c0_81] : memref<288x16xf32, #tpu.memory_space<vmem>>, vector<16x16xf32>
    %297 = arith.addf %295, %296 : vector<16x16xf32>
    %c32_82 = arith.constant 32 : index
    %c0_83 = arith.constant 0 : index
    %298 = vector.load %arg4[%c32_82, %c0_83] : memref<288x16xf32, #tpu.memory_space<vmem>>, vector<16x16xf32>
    %299 = vector.broadcast %250 : vector<1x16xf32> to vector<16x16xf32>
    %300 = arith.mulf %299, %298 : vector<16x16xf32>
    %c0_84 = arith.constant 0 : index
    %c0_85 = arith.constant 0 : index
    %301 = vector.load %arg4[%c0_84, %c0_85] : memref<288x16xf32, #tpu.memory_space<vmem>>, vector<16x16xf32>
    %302 = vector.broadcast %254 : vector<1x16xf32> to vector<16x16xf32>
    %303 = arith.mulf %302, %301 : vector<16x16xf32>
    %304 = arith.subf %300, %303 : vector<16x16xf32>
    %c64_86 = arith.constant 64 : index
    %c0_87 = arith.constant 0 : index
    %305 = vector.load %arg4[%c64_86, %c0_87] : memref<288x16xf32, #tpu.memory_space<vmem>>, vector<16x16xf32>
    %306 = arith.addf %304, %305 : vector<16x16xf32>
    %307 = arith.subf %297, %306 : vector<16x16xf32>
    %308 = vector.broadcast %199 : vector<1x16xf32> to vector<16x16xf32>
    %309 = arith.mulf %308, %307 : vector<16x16xf32>
    %310 = arith.addf %284, %309 : vector<16x16xf32>
    %311 = vector.broadcast %240 : vector<1x16xf32> to vector<16x16xf32>
    %312 = arith.mulf %311, %307 : vector<16x16xf32>
    %313 = arith.addf %286, %312 : vector<16x16xf32>
    %314 = vector.broadcast %246 : vector<1x16xf32> to vector<16x16xf32>
    %315 = arith.mulf %314, %307 : vector<16x16xf32>
    %316 = arith.addf %288, %315 : vector<16x16xf32>
    %c192_88 = arith.constant 192 : index
    %c0_89 = arith.constant 0 : index
    %317 = vector.load %arg4[%c192_88, %c0_89] : memref<288x16xf32, #tpu.memory_space<vmem>>, vector<16x16xf32>
    %318 = vector.broadcast %260 : vector<1x16xf32> to vector<16x16xf32>
    %319 = arith.mulf %318, %317 : vector<16x16xf32>
    %c208_90 = arith.constant 208 : index
    %c0_91 = arith.constant 0 : index
    %320 = vector.load %arg4[%c208_90, %c0_91] : memref<288x16xf32, #tpu.memory_space<vmem>>, vector<16x16xf32>
    %321 = vector.broadcast %257 : vector<1x16xf32> to vector<16x16xf32>
    %322 = arith.mulf %321, %320 : vector<16x16xf32>
    %323 = arith.subf %319, %322 : vector<16x16xf32>
    %c272 = arith.constant 272 : index
    %c0_92 = arith.constant 0 : index
    %324 = vector.load %arg4[%c272, %c0_92] : memref<288x16xf32, #tpu.memory_space<vmem>>, vector<16x16xf32>
    %325 = arith.addf %323, %324 : vector<16x16xf32>
    %c0_93 = arith.constant 0 : index
    %c0_94 = arith.constant 0 : index
    %326 = vector.load %arg4[%c0_93, %c0_94] : memref<288x16xf32, #tpu.memory_space<vmem>>, vector<16x16xf32>
    %327 = vector.broadcast %252 : vector<1x16xf32> to vector<16x16xf32>
    %328 = arith.mulf %327, %326 : vector<16x16xf32>
    %c16_95 = arith.constant 16 : index
    %c0_96 = arith.constant 0 : index
    %329 = vector.load %arg4[%c16_95, %c0_96] : memref<288x16xf32, #tpu.memory_space<vmem>>, vector<16x16xf32>
    %330 = vector.broadcast %250 : vector<1x16xf32> to vector<16x16xf32>
    %331 = arith.mulf %330, %329 : vector<16x16xf32>
    %332 = arith.subf %328, %331 : vector<16x16xf32>
    %c80_97 = arith.constant 80 : index
    %c0_98 = arith.constant 0 : index
    %333 = vector.load %arg4[%c80_97, %c0_98] : memref<288x16xf32, #tpu.memory_space<vmem>>, vector<16x16xf32>
    %334 = arith.addf %332, %333 : vector<16x16xf32>
    %335 = arith.subf %325, %334 : vector<16x16xf32>
    %336 = vector.broadcast %200 : vector<1x16xf32> to vector<16x16xf32>
    %337 = arith.mulf %336, %335 : vector<16x16xf32>
    %338 = arith.addf %310, %337 : vector<16x16xf32>
    %339 = vector.broadcast %242 : vector<1x16xf32> to vector<16x16xf32>
    %340 = arith.mulf %339, %335 : vector<16x16xf32>
    %341 = arith.addf %313, %340 : vector<16x16xf32>
    %342 = vector.broadcast %248 : vector<1x16xf32> to vector<16x16xf32>
    %343 = arith.mulf %342, %335 : vector<16x16xf32>
    %344 = arith.addf %316, %343 : vector<16x16xf32>
    %c16_99 = arith.constant 16 : index
    %c0_100 = arith.constant 0 : index
    %345 = vector.load %arg5[%c16_99, %c0_100] : memref<147x16xf32, #tpu.memory_space<vmem>>, vector<16x16xf32>
    tpu.vector_store %arg5[%c16_99, %c0_100], %338 {strides = array<i32>} : memref<147x16xf32, #tpu.memory_space<vmem>>, vector<16x16xf32>,
    %c80_101 = arith.constant 80 : index
    %c0_102 = arith.constant 0 : index
    %346 = vector.load %arg5[%c80_101, %c0_102] : memref<147x16xf32, #tpu.memory_space<vmem>>, vector<16x16xf32>
    tpu.vector_store %arg5[%c80_101, %c0_102], %341 {strides = array<i32>} : memref<147x16xf32, #tpu.memory_space<vmem>>, vector<16x16xf32>,
    %c96_103 = arith.constant 96 : index
    %c0_104 = arith.constant 0 : index
    %347 = vector.load %arg5[%c96_103, %c0_104] : memref<147x16xf32, #tpu.memory_space<vmem>>, vector<16x16xf32>
    tpu.vector_store %arg5[%c96_103, %c0_104], %344 {strides = array<i32>} : memref<147x16xf32, #tpu.memory_space<vmem>>, vector<16x16xf32>,
    %c2_105 = arith.constant 2 : index
    %348 = memref.load %arg1[%c2_105] : memref<3xf32, #tpu.memory_space<smem>>
    %c1_106 = arith.constant 1 : index
    %349 = memref.load %arg2[%c1_106] : memref<3xf32, #tpu.memory_space<smem>>
    %c2_107 = arith.constant 2 : index
    %350 = memref.load %arg2[%c2_107] : memref<3xf32, #tpu.memory_space<smem>>
    %c6_108 = arith.constant 6 : index
    %c0_109 = arith.constant 0 : index
    %351 = vector.load %arg3[%c6_108, %c0_109] : memref<9x16xf32, #tpu.memory_space<vmem>>, vector<1x16xf32>
    %c3_110 = arith.constant 3 : index
    %c0_111 = arith.constant 0 : index
    %352 = vector.load %arg3[%c3_110, %c0_111] : memref<9x16xf32, #tpu.memory_space<vmem>>, vector<1x16xf32>
    %353 = arith.subf %351, %352 : vector<1x16xf32>
    %c7_112 = arith.constant 7 : index
    %c0_113 = arith.constant 0 : index
    %354 = vector.load %arg3[%c7_112, %c0_113] : memref<9x16xf32, #tpu.memory_space<vmem>>, vector<1x16xf32>
    %c4_114 = arith.constant 4 : index
    %c0_115 = arith.constant 0 : index
    %355 = vector.load %arg3[%c4_114, %c0_115] : memref<9x16xf32, #tpu.memory_space<vmem>>, vector<1x16xf32>
    %356 = arith.subf %354, %355 : vector<1x16xf32>
    %c8_116 = arith.constant 8 : index
    %c0_117 = arith.constant 0 : index
    %357 = vector.load %arg3[%c8_116, %c0_117] : memref<9x16xf32, #tpu.memory_space<vmem>>, vector<1x16xf32>
    %c5_118 = arith.constant 5 : index
    %c0_119 = arith.constant 0 : index
    %358 = vector.load %arg3[%c5_118, %c0_119] : memref<9x16xf32, #tpu.memory_space<vmem>>, vector<1x16xf32>
    %359 = arith.subf %357, %358 : vector<1x16xf32>
    %360 = arith.mulf %353, %353 : vector<1x16xf32>
    %361 = arith.mulf %356, %356 : vector<1x16xf32>
    %362 = arith.addf %360, %361 : vector<1x16xf32>
    %363 = arith.mulf %359, %359 : vector<1x16xf32>
    %364 = arith.addf %362, %363 : vector<1x16xf32>
    %cst_120 = arith.constant 9.99999996E-13 : f32
    %365 = vector.broadcast %cst_120 : f32 to vector<1x16xf32>
    %366 = arith.addf %364, %365 : vector<1x16xf32>
    %367 = math.rsqrt %366 : vector<1x16xf32>
    %368 = arith.mulf %366, %367 : vector<1x16xf32>
    %369 = arith.addf %349, %350 : f32
    %370 = vector.broadcast %369 : f32 to vector<1x16xf32>
    %371 = arith.subf %368, %370 : vector<1x16xf32>
    %372 = arith.mulf %353, %367 : vector<1x16xf32>
    %373 = arith.mulf %356, %367 : vector<1x16xf32>
    %374 = arith.mulf %359, %367 : vector<1x16xf32>
    %375 = math.absf %372 : vector<1x16xf32>
    %cst_121 = arith.constant 0.899999976 : f32
    %376 = vector.broadcast %cst_121 : f32 to vector<1x16xf32>
    %377 = arith.cmpf olt, %375, %376 : vector<1x16xf32>
    %cst_122 = arith.constant 1.000000e+00 : f32
    %cst_123 = arith.constant 0.000000e+00 : f32
    %378 = vector.broadcast %cst_122 : f32 to vector<1x16xf32>
    %379 = vector.broadcast %cst_123 : f32 to vector<1x16xf32>
    %380 = arith.select %377, %378, %379 : vector<1x16xi1>, vector<1x16xf32>
    %cst_124 = arith.constant 1.000000e+00 : f32
    %381 = vector.broadcast %cst_124 : f32 to vector<1x16xf32>
    %382 = arith.subf %381, %380 : vector<1x16xf32>
    %383 = arith.mulf %380, %372 : vector<1x16xf32>
    %384 = arith.mulf %382, %373 : vector<1x16xf32>
    %385 = arith.addf %383, %384 : vector<1x16xf32>
    %386 = arith.mulf %385, %372 : vector<1x16xf32>
    %387 = arith.subf %380, %386 : vector<1x16xf32>
    %388 = arith.mulf %385, %373 : vector<1x16xf32>
    %389 = arith.subf %382, %388 : vector<1x16xf32>
    %cst_125 = arith.constant 0.000000e+00 : f32
    %390 = vector.broadcast %cst_125 : f32 to vector<1x16xf32>
    %391 = arith.subf %390, %385 : vector<1x16xf32>
    %392 = arith.mulf %391, %374 : vector<1x16xf32>
    %393 = arith.mulf %387, %387 : vector<1x16xf32>
    %394 = arith.mulf %389, %389 : vector<1x16xf32>
    %395 = arith.addf %393, %394 : vector<1x16xf32>
    %396 = arith.mulf %392, %392 : vector<1x16xf32>
    %397 = arith.addf %395, %396 : vector<1x16xf32>
    %398 = math.rsqrt %397 : vector<1x16xf32>
    %399 = arith.mulf %387, %398 : vector<1x16xf32>
    %400 = arith.mulf %389, %398 : vector<1x16xf32>
    %401 = arith.mulf %392, %398 : vector<1x16xf32>
    %402 = arith.mulf %373, %401 : vector<1x16xf32>
    %403 = arith.mulf %374, %400 : vector<1x16xf32>
    %404 = arith.subf %402, %403 : vector<1x16xf32>
    %405 = arith.mulf %374, %399 : vector<1x16xf32>
    %406 = arith.mulf %372, %401 : vector<1x16xf32>
    %407 = arith.subf %405, %406 : vector<1x16xf32>
    %408 = arith.mulf %372, %400 : vector<1x16xf32>
    %409 = arith.mulf %373, %399 : vector<1x16xf32>
    %410 = arith.subf %408, %409 : vector<1x16xf32>
    %411 = vector.broadcast %348 : f32 to vector<1x16xf32>
    %412 = arith.mulf %411, %399 : vector<1x16xf32>
    %413 = vector.broadcast %348 : f32 to vector<1x16xf32>
    %414 = arith.mulf %413, %400 : vector<1x16xf32>
    %415 = vector.broadcast %348 : f32 to vector<1x16xf32>
    %416 = arith.mulf %415, %401 : vector<1x16xf32>
    %417 = vector.broadcast %348 : f32 to vector<1x16xf32>
    %418 = arith.mulf %417, %404 : vector<1x16xf32>
    %419 = vector.broadcast %348 : f32 to vector<1x16xf32>
    %420 = arith.mulf %419, %407 : vector<1x16xf32>
    %421 = vector.broadcast %348 : f32 to vector<1x16xf32>
    %422 = arith.mulf %421, %410 : vector<1x16xf32>
    %423 = vector.broadcast %349 : f32 to vector<1x16xf32>
    %424 = arith.mulf %423, %372 : vector<1x16xf32>
    %425 = vector.broadcast %349 : f32 to vector<1x16xf32>
    %426 = arith.mulf %425, %373 : vector<1x16xf32>
    %427 = vector.broadcast %349 : f32 to vector<1x16xf32>
    %428 = arith.mulf %427, %374 : vector<1x16xf32>
    %cst_126 = arith.constant 0.000000e+00 : f32
    %429 = arith.subf %cst_126, %350 : f32
    %430 = vector.broadcast %429 : f32 to vector<1x16xf32>
    %431 = arith.mulf %430, %372 : vector<1x16xf32>
    %cst_127 = arith.constant 0.000000e+00 : f32
    %432 = arith.subf %cst_127, %350 : f32
    %433 = vector.broadcast %432 : f32 to vector<1x16xf32>
    %434 = arith.mulf %433, %373 : vector<1x16xf32>
    %cst_128 = arith.constant 0.000000e+00 : f32
    %435 = arith.subf %cst_128, %350 : f32
    %436 = vector.broadcast %435 : f32 to vector<1x16xf32>
    %437 = arith.mulf %436, %374 : vector<1x16xf32>
    %c208_129 = arith.constant 208 : index
    %c0_130 = arith.constant 0 : index
    %438 = vector.load %arg4[%c208_129, %c0_130] : memref<288x16xf32, #tpu.memory_space<vmem>>, vector<16x16xf32>
    %439 = vector.broadcast %437 : vector<1x16xf32> to vector<16x16xf32>
    %440 = arith.mulf %439, %438 : vector<16x16xf32>
    %c224_131 = arith.constant 224 : index
    %c0_132 = arith.constant 0 : index
    %441 = vector.load %arg4[%c224_131, %c0_132] : memref<288x16xf32, #tpu.memory_space<vmem>>, vector<16x16xf32>
    %442 = vector.broadcast %434 : vector<1x16xf32> to vector<16x16xf32>
    %443 = arith.mulf %442, %441 : vector<16x16xf32>
    %444 = arith.subf %440, %443 : vector<16x16xf32>
    %c240_133 = arith.constant 240 : index
    %c0_134 = arith.constant 0 : index
    %445 = vector.load %arg4[%c240_133, %c0_134] : memref<288x16xf32, #tpu.memory_space<vmem>>, vector<16x16xf32>
    %446 = arith.addf %444, %445 : vector<16x16xf32>
    %c112_135 = arith.constant 112 : index
    %c0_136 = arith.constant 0 : index
    %447 = vector.load %arg4[%c112_135, %c0_136] : memref<288x16xf32, #tpu.memory_space<vmem>>, vector<16x16xf32>
    %448 = vector.broadcast %428 : vector<1x16xf32> to vector<16x16xf32>
    %449 = arith.mulf %448, %447 : vector<16x16xf32>
    %c128_137 = arith.constant 128 : index
    %c0_138 = arith.constant 0 : index
    %450 = vector.load %arg4[%c128_137, %c0_138] : memref<288x16xf32, #tpu.memory_space<vmem>>, vector<16x16xf32>
    %451 = vector.broadcast %426 : vector<1x16xf32> to vector<16x16xf32>
    %452 = arith.mulf %451, %450 : vector<16x16xf32>
    %453 = arith.subf %449, %452 : vector<16x16xf32>
    %c144_139 = arith.constant 144 : index
    %c0_140 = arith.constant 0 : index
    %454 = vector.load %arg4[%c144_139, %c0_140] : memref<288x16xf32, #tpu.memory_space<vmem>>, vector<16x16xf32>
    %455 = arith.addf %453, %454 : vector<16x16xf32>
    %456 = arith.subf %446, %455 : vector<16x16xf32>
    %457 = vector.broadcast %372 : vector<1x16xf32> to vector<16x16xf32>
    %458 = arith.mulf %457, %456 : vector<16x16xf32>
    %459 = vector.broadcast %412 : vector<1x16xf32> to vector<16x16xf32>
    %460 = arith.mulf %459, %456 : vector<16x16xf32>
    %461 = vector.broadcast %418 : vector<1x16xf32> to vector<16x16xf32>
    %462 = arith.mulf %461, %456 : vector<16x16xf32>
    %c224_141 = arith.constant 224 : index
    %c0_142 = arith.constant 0 : index
    %463 = vector.load %arg4[%c224_141, %c0_142] : memref<288x16xf32, #tpu.memory_space<vmem>>, vector<16x16xf32>
    %464 = vector.broadcast %431 : vector<1x16xf32> to vector<16x16xf32>
    %465 = arith.mulf %464, %463 : vector<16x16xf32>
    %c192_143 = arith.constant 192 : index
    %c0_144 = arith.constant 0 : index
    %466 = vector.load %arg4[%c192_143, %c0_144] : memref<288x16xf32, #tpu.memory_space<vmem>>, vector<16x16xf32>
    %467 = vector.broadcast %437 : vector<1x16xf32> to vector<16x16xf32>
    %468 = arith.mulf %467, %466 : vector<16x16xf32>
    %469 = arith.subf %465, %468 : vector<16x16xf32>
    %c256_145 = arith.constant 256 : index
    %c0_146 = arith.constant 0 : index
    %470 = vector.load %arg4[%c256_145, %c0_146] : memref<288x16xf32, #tpu.memory_space<vmem>>, vector<16x16xf32>
    %471 = arith.addf %469, %470 : vector<16x16xf32>
    %c128_147 = arith.constant 128 : index
    %c0_148 = arith.constant 0 : index
    %472 = vector.load %arg4[%c128_147, %c0_148] : memref<288x16xf32, #tpu.memory_space<vmem>>, vector<16x16xf32>
    %473 = vector.broadcast %424 : vector<1x16xf32> to vector<16x16xf32>
    %474 = arith.mulf %473, %472 : vector<16x16xf32>
    %c96_149 = arith.constant 96 : index
    %c0_150 = arith.constant 0 : index
    %475 = vector.load %arg4[%c96_149, %c0_150] : memref<288x16xf32, #tpu.memory_space<vmem>>, vector<16x16xf32>
    %476 = vector.broadcast %428 : vector<1x16xf32> to vector<16x16xf32>
    %477 = arith.mulf %476, %475 : vector<16x16xf32>
    %478 = arith.subf %474, %477 : vector<16x16xf32>
    %c160_151 = arith.constant 160 : index
    %c0_152 = arith.constant 0 : index
    %479 = vector.load %arg4[%c160_151, %c0_152] : memref<288x16xf32, #tpu.memory_space<vmem>>, vector<16x16xf32>
    %480 = arith.addf %478, %479 : vector<16x16xf32>
    %481 = arith.subf %471, %480 : vector<16x16xf32>
    %482 = vector.broadcast %373 : vector<1x16xf32> to vector<16x16xf32>
    %483 = arith.mulf %482, %481 : vector<16x16xf32>
    %484 = arith.addf %458, %483 : vector<16x16xf32>
    %485 = vector.broadcast %414 : vector<1x16xf32> to vector<16x16xf32>
    %486 = arith.mulf %485, %481 : vector<16x16xf32>
    %487 = arith.addf %460, %486 : vector<16x16xf32>
    %488 = vector.broadcast %420 : vector<1x16xf32> to vector<16x16xf32>
    %489 = arith.mulf %488, %481 : vector<16x16xf32>
    %490 = arith.addf %462, %489 : vector<16x16xf32>
    %c192_153 = arith.constant 192 : index
    %c0_154 = arith.constant 0 : index
    %491 = vector.load %arg4[%c192_153, %c0_154] : memref<288x16xf32, #tpu.memory_space<vmem>>, vector<16x16xf32>
    %492 = vector.broadcast %434 : vector<1x16xf32> to vector<16x16xf32>
    %493 = arith.mulf %492, %491 : vector<16x16xf32>
    %c208_155 = arith.constant 208 : index
    %c0_156 = arith.constant 0 : index
    %494 = vector.load %arg4[%c208_155, %c0_156] : memref<288x16xf32, #tpu.memory_space<vmem>>, vector<16x16xf32>
    %495 = vector.broadcast %431 : vector<1x16xf32> to vector<16x16xf32>
    %496 = arith.mulf %495, %494 : vector<16x16xf32>
    %497 = arith.subf %493, %496 : vector<16x16xf32>
    %c272_157 = arith.constant 272 : index
    %c0_158 = arith.constant 0 : index
    %498 = vector.load %arg4[%c272_157, %c0_158] : memref<288x16xf32, #tpu.memory_space<vmem>>, vector<16x16xf32>
    %499 = arith.addf %497, %498 : vector<16x16xf32>
    %c96_159 = arith.constant 96 : index
    %c0_160 = arith.constant 0 : index
    %500 = vector.load %arg4[%c96_159, %c0_160] : memref<288x16xf32, #tpu.memory_space<vmem>>, vector<16x16xf32>
    %501 = vector.broadcast %426 : vector<1x16xf32> to vector<16x16xf32>
    %502 = arith.mulf %501, %500 : vector<16x16xf32>
    %c112_161 = arith.constant 112 : index
    %c0_162 = arith.constant 0 : index
    %503 = vector.load %arg4[%c112_161, %c0_162] : memref<288x16xf32, #tpu.memory_space<vmem>>, vector<16x16xf32>
    %504 = vector.broadcast %424 : vector<1x16xf32> to vector<16x16xf32>
    %505 = arith.mulf %504, %503 : vector<16x16xf32>
    %506 = arith.subf %502, %505 : vector<16x16xf32>
    %c176_163 = arith.constant 176 : index
    %c0_164 = arith.constant 0 : index
    %507 = vector.load %arg4[%c176_163, %c0_164] : memref<288x16xf32, #tpu.memory_space<vmem>>, vector<16x16xf32>
    %508 = arith.addf %506, %507 : vector<16x16xf32>
    %509 = arith.subf %499, %508 : vector<16x16xf32>
    %510 = vector.broadcast %374 : vector<1x16xf32> to vector<16x16xf32>
    %511 = arith.mulf %510, %509 : vector<16x16xf32>
    %512 = arith.addf %484, %511 : vector<16x16xf32>
    %513 = vector.broadcast %416 : vector<1x16xf32> to vector<16x16xf32>
    %514 = arith.mulf %513, %509 : vector<16x16xf32>
    %515 = arith.addf %487, %514 : vector<16x16xf32>
    %516 = vector.broadcast %422 : vector<1x16xf32> to vector<16x16xf32>
    %517 = arith.mulf %516, %509 : vector<16x16xf32>
    %518 = arith.addf %490, %517 : vector<16x16xf32>
    %c32_165 = arith.constant 32 : index
    %c0_166 = arith.constant 0 : index
    %519 = vector.load %arg5[%c32_165, %c0_166] : memref<147x16xf32, #tpu.memory_space<vmem>>, vector<16x16xf32>
    tpu.vector_store %arg5[%c32_165, %c0_166], %512 {strides = array<i32>} : memref<147x16xf32, #tpu.memory_space<vmem>>, vector<16x16xf32>,
    %c112_167 = arith.constant 112 : index
    %c0_168 = arith.constant 0 : index
    %520 = vector.load %arg5[%c112_167, %c0_168] : memref<147x16xf32, #tpu.memory_space<vmem>>, vector<16x16xf32>
    tpu.vector_store %arg5[%c112_167, %c0_168], %515 {strides = array<i32>} : memref<147x16xf32, #tpu.memory_space<vmem>>, vector<16x16xf32>,
    %c128_169 = arith.constant 128 : index
    %c0_170 = arith.constant 0 : index
    %521 = vector.load %arg5[%c128_169, %c0_170] : memref<147x16xf32, #tpu.memory_space<vmem>>, vector<16x16xf32>
    tpu.vector_store %arg5[%c128_169, %c0_170], %518 {strides = array<i32>} : memref<147x16xf32, #tpu.memory_space<vmem>>, vector<16x16xf32>,
    %522 = tpu.concatenate %23, %197, %371 in 0 : vector<1x16xf32>, vector<1x16xf32>, vector<1x16xf32> -> vector<3x16xf32>
    %c144_171 = arith.constant 144 : index
    %c0_172 = arith.constant 0 : index
    %523 = vector.load %arg5[%c144_171, %c0_172] : memref<147x16xf32, #tpu.memory_space<vmem>>, vector<3x16xf32>
    tpu.vector_store %arg5[%c144_171, %c0_172], %522 {strides = array<i32>} : memref<147x16xf32, #tpu.memory_space<vmem>>, vector<3x16xf32>,
    return
  }
  func.func @transform_0(%arg0: i32) -> i32 {
    %c0_i32 = arith.constant 0 : i32
    %c0_i32_0 = arith.constant 0 : i32
    return %c0_i32 : i32
  }
  func.func @transform_1(%arg0: i32) -> i32 {
    %c0_i32 = arith.constant 0 : i32
    %c0_i32_0 = arith.constant 0 : i32
    return %c0_i32 : i32
  }
  func.func @transform_2(%arg0: i32) -> (i32, i32) {
    %c0_i32 = arith.constant 0 : i32
    %c0_i32_0 = arith.constant 0 : i32
    return %c0_i32, %arg0 : i32, i32
  }
  func.func @transform_3(%arg0: i32) -> (i32, i32) {
    %c0_i32 = arith.constant 0 : i32
    %c0_i32_0 = arith.constant 0 : i32
    return %c0_i32, %arg0 : i32, i32
  }
  func.func @transform_4(%arg0: i32) -> (i32, i32) {
    %c0_i32 = arith.constant 0 : i32
    %c0_i32_0 = arith.constant 0 : i32
    return %c0_i32, %arg0 : i32, i32
  }
}

</mosaic_0001>

<llo_original>
// kernel: contact_terms_forward.1
$region0: #{contact_terms_forward.1}
  #allocation0 [shape = 'u32[]', space=smem, size = 0x4, offset = 0x4, fixed_abs, tag = 'smem constant byte address 0x4 - core index']
  #allocation1 [shape = 'u32[72,128]{1,0:T(1,128)}', space=vmem, size = 0x9000, scoped, tag = 'internal scratch']
  %s0 = inlined_call_operand.vmem [shape: f32[3], index: 0, kind: input, shape index: {}]
  %s1 = inlined_call_operand.vmem [shape: f32[3], index: 1, kind: input, shape index: {}]
  %s2 = inlined_call_operand.vmem [shape: f32[9,16], index: 2, kind: input, shape index: {}]
  %s3 = inlined_call_operand.vmem [shape: f32[288,16], index: 3, kind: input, shape index: {}]
  %s4 = inlined_call_operand.vmem [shape: f32[147,16], index: 4, kind: output, shape index: {}]
  %s5 = sld [smem:[#allocation0]]
  $region34: #{contact_terms_forward.1} parent=0
    _
  %s7 = ssub.s32 1, %s5
  %s8 = scalar_select 0, %s7, %s5
  $region1: #{contact_terms_forward.1} parent=0
    #allocation2 [shape = 'u8[512]{0}', space=smem, size = 0x200, scoped, tag = 'input window, operand 0, single buffered']
    #allocation3 [shape = 's32[1]{0}', space=sflag, size = 0x4, scoped, tag = 'scoped memory for contact_terms_forward.1']
    #allocation4 [shape = 'u8[512]{0}', space=smem, size = 0x200, scoped, tag = 'input window, operand 1, single buffered']
    #allocation5 [shape = 's32[1]{0}', space=sflag, size = 0x4, scoped, tag = 'scoped memory for contact_terms_forward.1']
    %9 = vsyncpa [#allocation3], 0
    %10 = vsyncpa [#allocation5], 0
    // Predicated region
    $region2: #{contact_terms_forward.1} parent=1 // pred_check
      _
    $region3: #{contact_terms_forward.1} parent=1 // pred_check_branch
      %12 = sbr.rel (0) target = $region5
    $region4: #{contact_terms_forward.1} parent=1 // pred_region
      %14 = vsyncadd [#allocation3], 0
      %s16 = sshll.u32 %s0, 4
      %s17 = int_to_ptr.vmem [resolvable:$true] %s16
      %19 = dma.vmem_to_smem %s17, 16, [#allocation2], [#allocation3]
    $region5: #{contact_terms_forward.1} parent=1 // pred_fallthru
      _
    // Predicated region
    $region6: #{contact_terms_forward.1} parent=1 // pred_check
      _
    $region7: #{contact_terms_forward.1} parent=1 // pred_check_branch
      %21 = sbr.rel (0) target = $region9
    $region8: #{contact_terms_forward.1} parent=1 // pred_region
      %23 = vsyncadd [#allocation5], 0
      %s25 = sshll.u32 %s1, 4
      %s26 = int_to_ptr.vmem [resolvable:$true] %s25
      %28 = dma.vmem_to_smem %s26, 16, [#allocation4], [#allocation5]
    $region9: #{contact_terms_forward.1} parent=1 // pred_fallthru
      _
    // Predicated region
    $region10: #{contact_terms_forward.1} parent=1 // pred_check
      _
    $region11: #{contact_terms_forward.1} parent=1 // pred_check_branch
      %30 = sbr.rel (0) target = $region13
    $region12: #{contact_terms_forward.1} parent=1 // pred_region
      _
    $region13: #{contact_terms_forward.1} parent=1 // pred_fallthru
      _
    // Predicated region
    $region14: #{contact_terms_forward.1} parent=1 // pred_check
      _
    $region15: #{contact_terms_forward.1} parent=1 // pred_check_branch
      %32 = sbr.rel (0) target = $region17
    $region16: #{contact_terms_forward.1} parent=1 // pred_region
      _
    $region17: #{contact_terms_forward.1} parent=1 // pred_fallthru
      _
    // Predicated region
    $region18: #{contact_terms_forward.1} parent=1 // pred_check
      _
    $region19: #{contact_terms_forward.1} parent=1 // pred_check_branch
      %34 = sbr.rel (0) target = $region21
    $region20: #{contact_terms_forward.1} parent=1 // pred_region
      %36 = dma.done [#allocation3], 16
    $region21: #{contact_terms_forward.1} parent=1 // pred_fallthru
      _
    // Predicated region
    $region22: #{contact_terms_forward.1} parent=1 // pred_check
      _
    $region23: #{contact_terms_forward.1} parent=1 // pred_check_branch
      %38 = sbr.rel (0) target = $region25
    $region24: #{contact_terms_forward.1} parent=1 // pred_region
      %40 = dma.done [#allocation5], 16
    $region25: #{contact_terms_forward.1} parent=1 // pred_fallthru
      _
    %41 = sfence
    %s42 = sld [smem:[#allocation2]]
    %s43 = sld [smem:[#allocation4]]
    %s44 = sld [smem:[#allocation4 + $0x1]]
    %v45 = vld [vmem:[%s2 + $0x3] sm:$0x1]
    %v46 = vld [vmem:[%s2] sm:$0x1]
    %v47 = vsub.f32 %v45, %v46
    %v48 = vld [vmem:[%s2 + $0x4] sm:$0x1]
    %v49 = vld [vmem:[%s2 + $0x1] sm:$0x1]
    %v50 = vsub.f32 %v48, %v49
    %v51 = vld [vmem:[%s2 + $0x5] sm:$0x1]
    %v52 = vld [vmem:[%s2 + $0x2] sm:$0x1]
    %v53 = vsub.f32 %v51, %v52
    %v54 = vmul.f32 %v47, %v47
    %v55 = vmul.f32 %v50, %v50
    %v56 = vadd.f32 %v54, %v55
    %v57 = vmul.f32 %v53, %v53
    %v58 = vadd.f32 %v56, %v57
    %v59 = vadd.f32 %v58, 1e-12
    %v60 = vrsqrt.pop %v59
    %v61 = vmul.f32 %v60, %v59
    %v62 = vmul.f32 %v61, %v60
    %v63 = vmul.f32 0.5, %v62
    %v64 = vsub.f32 1.5, %v63
    %v65 = vmul.f32 %v60, %v64
    %vm66 = vweird.f32 %v59
    %vm67 = vweird.f32 %v60
    %vm68 = vmor %vm66, %vm67
    %v69 = vsel %vm68, %v60, %v65
    %v70 = vmul.f32 %v59, %v69
    %s71 = sadd.f32 %s43, %s44
    %v72 = vstv %s71
    %v73 = vsub.f32 %v70, %v72
    %v74 = vmul.f32 %v47, %v69
    %v75 = vmul.f32 %v50, %v69
    %v76 = vmul.f32 %v53, %v69
    %v77 = vand.u32 2147483647, %v74
    %vm78 = vcmp.lt.f32.partialorder %v77, 0.9
    %v79 = vsel %vm78, 1.0, 0.0
    %v80 = vsub.f32 1.0, %v79
    %v81 = vmul.f32 %v79, %v74
    %v82 = vmul.f32 %v80, %v75
    %v83 = vadd.f32 %v81, %v82
    %v84 = vmul.f32 %v83, %v74
    %v85 = vsub.f32 %v79, %v84
    %v86 = vmul.f32 %v83, %v75
    %v87 = vsub.f32 %v80, %v86
    %v88 = vsub.f32 0.0, %v83
    %v89 = vmul.f32 %v88, %v76
    %v90 = vmul.f32 %v85, %v85
    %v91 = vmul.f32 %v87, %v87
    %v92 = vadd.f32 %v90, %v91
    %v93 = vmul.f32 %v89, %v89
    %v94 = vadd.f32 %v92, %v93
    %v95 = vrsqrt.pop %v94
    %v96 = vmul.f32 %v95, %v94
    %v97 = vmul.f32 %v96, %v95
    %v98 = vmul.f32 0.5, %v97
    %v99 = vsub.f32 1.5, %v98
    %v100 = vmul.f32 %v95, %v99
    %vm101 = vweird.f32 %v94
    %vm102 = vweird.f32 %v95
    %vm103 = vmor %vm101, %vm102
    %v104 = vsel %vm103, %v95, %v100
    %v105 = vmul.f32 %v85, %v104
    %v106 = vmul.f32 %v87, %v104
    %v107 = vmul.f32 %v89, %v104
    %v108 = vmul.f32 %v75, %v107
    %v109 = vmul.f32 %v76, %v106
    %v110 = vsub.f32 %v108, %v109
    %v111 = vmul.f32 %v76, %v105
    %v112 = vmul.f32 %v74, %v107
    %v113 = vsub.f32 %v111, %v112
    %v114 = vmul.f32 %v74, %v106
    %v115 = vmul.f32 %v75, %v105
    %v116 = vsub.f32 %v114, %v115
    %v117 = vstv %s42
    %v118 = vmul.f32 %v117, %v105
    %v119 = vmul.f32 %v117, %v106
    %v120 = vmul.f32 %v117, %v107
    %v121 = vmul.f32 %v117, %v110
    %v122 = vmul.f32 %v117, %v113
    %v123 = vmul.f32 %v117, %v116
    %v124 = vstv %s43
    %v125 = vmul.f32 %v124, %v74
    %v126 = vmul.f32 %v124, %v75
    %v127 = vmul.f32 %v124, %v76
    %s128 = ssub.f32 0.0, %s44
    %v129 = vstv %s128
    %v130 = vmul.f32 %v129, %v74
    %v131 = vmul.f32 %v129, %v75
    %v132 = vmul.f32 %v129, %v76
    %v133 = vld [vmem:[%s3 + $0x70] sm:$0xff]
    %v134 = vld [vmem:[%s3 + $0x78] sm:$0xff]
    %v135 = vperm.slane %v132, 0
    %v136 = vmul.f32 %v135, %v133
    %v137 = vmul.f32 %v135, %v134
    %v138 = vld [vmem:[%s3 + $0x80] sm:$0xff]
    %v139 = vld [vmem:[%s3 + $0x88] sm:$0xff]
    %v140 = vperm.slane %v131, 0
    %v141 = vmul.f32 %v140, %v138
    %v142 = vmul.f32 %v140, %v139
    %v143 = vsub.f32 %v136, %v141
    %v144 = vsub.f32 %v137, %v142
    %v145 = vld [vmem:[%s3 + $0x90] sm:$0xff]
    %v146 = vld [vmem:[%s3 + $0x98] sm:$0xff]
    %v147 = vadd.f32 %v143, %v145
    %v148 = vadd.f32 %v144, %v146
    %v149 = vld [vmem:[%s3 + $0x10] sm:$0xff]
    %v150 = vld [vmem:[%s3 + $0x18] sm:$0xff]
    %v151 = vperm.slane %v127, 0
    %v152 = vmul.f32 %v151, %v149
    %v153 = vmul.f32 %v151, %v150
    %v154 = vld [vmem:[%s3 + $0x20] sm:$0xff]
    %v155 = vld [vmem:[%s3 + $0x28] sm:$0xff]
    %v156 = vperm.slane %v126, 0
    %v157 = vmul.f32 %v156, %v154
    %v158 = vmul.f32 %v156, %v155
    %v159 = vsub.f32 %v152, %v157
    %v160 = vsub.f32 %v153, %v158
    %v161 = vld [vmem:[%s3 + $0x30] sm:$0xff]
    %v162 = vld [vmem:[%s3 + $0x38] sm:$0xff]
    %v163 = vadd.f32 %v159, %v161
    %v164 = vadd.f32 %v160, %v162
    %v165 = vsub.f32 %v147, %v163
    %v166 = vsub.f32 %v148, %v164
    %v167 = vperm.slane %v74, 0
    %v168 = vmul.f32 %v167, %v165
    %v169 = vmul.f32 %v167, %v166
    %v170 = vperm.slane %v118, 0
    %v171 = vmul.f32 %v170, %v165
    %v172 = vmul.f32 %v170, %v166
    %v173 = vperm.slane %v121, 0
    %v174 = vmul.f32 %v173, %v165
    %v175 = vmul.f32 %v173, %v166
    %v176 = vperm.slane %v130, 0
    %v177 = vmul.f32 %v176, %v138
    %v178 = vmul.f32 %v176, %v139
    %v179 = vld [vmem:[%s3 + $0x60] sm:$0xff]
    %v180 = vld [vmem:[%s3 + $0x68] sm:$0xff]
    %v181 = vmul.f32 %v135, %v179
    %v182 = vmul.f32 %v135, %v180
    %v183 = vsub.f32 %v177, %v181
    %v184 = vsub.f32 %v178, %v182
    %v185 = vld [vmem:[%s3 + $0xa0] sm:$0xff]
    %v186 = vld [vmem:[%s3 + $0xa8] sm:$0xff]
    %v187 = vadd.f32 %v183, %v185
    %v188 = vadd.f32 %v184, %v186
    %v189 = vperm.slane %v125, 0
    %v190 = vmul.f32 %v189, %v154
    %v191 = vmul.f32 %v189, %v155
    %v192 = vld [vmem:[%s3] sm:$0xff]
    %v193 = vld [vmem:[%s3 + $0x8] sm:$0xff]
    %v194 = vmul.f32 %v151, %v192
    %v195 = vmul.f32 %v151, %v193
    %v196 = vsub.f32 %v190, %v194
    %v197 = vsub.f32 %v191, %v195
    %v198 = vld [vmem:[%s3 + $0x40] sm:$0xff]
    %v199 = vld [vmem:[%s3 + $0x48] sm:$0xff]
    %v200 = vadd.f32 %v196, %v198
    %v201 = vadd.f32 %v197, %v199
    %v202 = vsub.f32 %v187, %v200
    %v203 = vsub.f32 %v188, %v201
    %v204 = vperm.slane %v75, 0
    %v205 = vmul.f32 %v204, %v202
    %v206 = vmul.f32 %v204, %v203
    %v207 = vadd.f32 %v168, %v205
    %v208 = vadd.f32 %v169, %v206
    %v209 = vperm.slane %v119, 0
    %v210 = vmul.f32 %v209, %v202
    %v211 = vmul.f32 %v209, %v203
    %v212 = vadd.f32 %v171, %v210
    %v213 = vadd.f32 %v172, %v211
    %v214 = vperm.slane %v122, 0
    %v215 = vmul.f32 %v214, %v202
    %v216 = vmul.f32 %v214, %v203
    %v217 = vadd.f32 %v174, %v215
    %v218 = vadd.f32 %v175, %v216
    %v219 = vmul.f32 %v140, %v179
    %v220 = vmul.f32 %v140, %v180
    %v221 = vmul.f32 %v176, %v133
    %v222 = vmul.f32 %v176, %v134
    %v223 = vsub.f32 %v219, %v221
    %v224 = vsub.f32 %v220, %v222
    %v225 = vld [vmem:[%s3 + $0xb0] sm:$0xff]
    %v226 = vld [vmem:[%s3 + $0xb8] sm:$0xff]
    %v227 = vadd.f32 %v223, %v225
    %v228 = vadd.f32 %v224, %v226
    %v229 = vmul.f32 %v156, %v192
    %v230 = vmul.f32 %v156, %v193
    %v231 = vmul.f32 %v189, %v149
    %v232 = vmul.f32 %v189, %v150
    %v233 = vsub.f32 %v229, %v231
    %v234 = vsub.f32 %v230, %v232
    %v235 = vld [vmem:[%s3 + $0x50] sm:$0xff]
    %v236 = vld [vmem:[%s3 + $0x58] sm:$0xff]
    %v237 = vadd.f32 %v233, %v235
    %v238 = vadd.f32 %v234, %v236
    %v239 = vsub.f32 %v227, %v237
    %v240 = vsub.f32 %v228, %v238
    %v241 = vperm.slane %v76, 0
    %v242 = vmul.f32 %v241, %v239
    %v243 = vmul.f32 %v241, %v240
    %v244 = vadd.f32 %v207, %v242
    %v245 = vadd.f32 %v208, %v243
    %v246 = vperm.slane %v120, 0
    %v247 = vmul.f32 %v246, %v239
    %v248 = vmul.f32 %v246, %v240
    %v249 = vadd.f32 %v212, %v247
    %v250 = vadd.f32 %v213, %v248
    %v251 = vperm.slane %v123, 0
    %v252 = vmul.f32 %v251, %v239
    %v253 = vmul.f32 %v251, %v240
    %v254 = vadd.f32 %v217, %v252
    %v255 = vadd.f32 %v218, %v253
    %vm256 = vcmask 130048
    %257 = vst.msk [vmem:[%s4] sm:$0xff] %vm256, %v244
    %258 = vst.msk [vmem:[%s4 + $0x8] sm:$0xff] %vm256, %v245
    %259 = vst.msk [vmem:[%s4 + $0x30] sm:$0xff] %vm256, %v249
    %260 = vst.msk [vmem:[%s4 + $0x38] sm:$0xff] %vm256, %v250
    %261 = vst.msk [vmem:[%s4 + $0x40] sm:$0xff] %vm256, %v254
    %262 = vst.msk [vmem:[%s4 + $0x48] sm:$0xff] %vm256, %v255
    %s263 = sld [smem:[#allocation2 + $0x1]]
    %s264 = sld [smem:[#allocation4]]
    %s265 = sld [smem:[#allocation4 + $0x2]]
    %v266 = vld [vmem:[%s2 + $0x6] sm:$0x1]
    %v267 = vld [vmem:[%s2] sm:$0x1]
    %v268 = vsub.f32 %v266, %v267
    %v269 = vld [vmem:[%s2 + $0x7] sm:$0x1]
    %v270 = vld [vmem:[%s2 + $0x1] sm:$0x1]
    %v271 = vsub.f32 %v269, %v270
    %v272 = vld [vmem:[%s2 + $0x8] sm:$0x1]
    %v273 = vld [vmem:[%s2 + $0x2] sm:$0x1]
    %v274 = vsub.f32 %v272, %v273
    %v275 = vmul.f32 %v268, %v268
    %v276 = vmul.f32 %v271, %v271
    %v277 = vadd.f32 %v275, %v276
    %v278 = vmul.f32 %v274, %v274
    %v279 = vadd.f32 %v277, %v278
    %v280 = vadd.f32 %v279, 1e-12
    %v281 = vrsqrt.pop %v280
    %v282 = vmul.f32 %v281, %v280
    %v283 = vmul.f32 %v282, %v281
    %v284 = vmul.f32 0.5, %v283
    %v285 = vsub.f32 1.5, %v284
    %v286 = vmul.f32 %v281, %v285
    %vm287 = vweird.f32 %v280
    %vm288 = vweird.f32 %v281
    %vm289 = vmor %vm287, %vm288
    %v290 = vsel %vm289, %v281, %v286
    %v291 = vmul.f32 %v280, %v290
    %s292 = sadd.f32 %s264, %s265
    %v293 = vstv %s292
    %v294 = vsub.f32 %v291, %v293
    %v295 = vmul.f32 %v268, %v290
    %v296 = vmul.f32 %v271, %v290
    %v297 = vmul.f32 %v274, %v290
    %v298 = vand.u32 2147483647, %v295
    %vm299 = vcmp.lt.f32.partialorder %v298, 0.9
    %v300 = vsel %vm299, 1.0, 0.0
    %v301 = vsub.f32 1.0, %v300
    %v302 = vmul.f32 %v300, %v295
    %v303 = vmul.f32 %v301, %v296
    %v304 = vadd.f32 %v302, %v303
    %v305 = vmul.f32 %v304, %v295
    %v306 = vsub.f32 %v300, %v305
    %v307 = vmul.f32 %v304, %v296
    %v308 = vsub.f32 %v301, %v307
    %v309 = vsub.f32 0.0, %v304
    %v310 = vmul.f32 %v309, %v297
    %v311 = vmul.f32 %v306, %v306
    %v312 = vmul.f32 %v308, %v308
    %v313 = vadd.f32 %v311, %v312
    %v314 = vmul.f32 %v310, %v310
    %v315 = vadd.f32 %v313, %v314
    %v316 = vrsqrt.pop %v315
    %v317 = vmul.f32 %v316, %v315
    %v318 = vmul.f32 %v317, %v316
    %v319 = vmul.f32 0.5, %v318
    %v320 = vsub.f32 1.5, %v319
    %v321 = vmul.f32 %v316, %v320
    %vm322 = vweird.f32 %v315
    %vm323 = vweird.f32 %v316
    %vm324 = vmor %vm322, %vm323
    %v325 = vsel %vm324, %v316, %v321
    %v326 = vmul.f32 %v306, %v325
    %v327 = vmul.f32 %v308, %v325
    %v328 = vmul.f32 %v310, %v325
    %v329 = vmul.f32 %v296, %v328
    %v330 = vmul.f32 %v297, %v327
    %v331 = vsub.f32 %v329, %v330
    %v332 = vmul.f32 %v297, %v326
    %v333 = vmul.f32 %v295, %v328
    %v334 = vsub.f32 %v332, %v333
    %v335 = vmul.f32 %v295, %v327
    %v336 = vmul.f32 %v296, %v326
    %v337 = vsub.f32 %v335, %v336
    %v338 = vstv %s263
    %v339 = vmul.f32 %v338, %v326
    %v340 = vmul.f32 %v338, %v327
    %v341 = vmul.f32 %v338, %v328
    %v342 = vmul.f32 %v338, %v331
    %v343 = vmul.f32 %v338, %v334
    %v344 = vmul.f32 %v338, %v337
    %v345 = vstv %s264
    %v346 = vmul.f32 %v345, %v295
    %v347 = vmul.f32 %v345, %v296
    %v348 = vmul.f32 %v345, %v297
    %s349 = ssub.f32 0.0, %s265
    %v350 = vstv %s349
    %v351 = vmul.f32 %v350, %v295
    %v352 = vmul.f32 %v350, %v296
    %v353 = vmul.f32 %v350, %v297
    %v354 = vld [vmem:[%s3 + $0xd0] sm:$0xff]
    %v355 = vld [vmem:[%s3 + $0xd8] sm:$0xff]
    %v356 = vperm.slane %v353, 0
    %v357 = vmul.f32 %v356, %v354
    %v358 = vmul.f32 %v356, %v355
    %v359 = vld [vmem:[%s3 + $0xe0] sm:$0xff]
    %v360 = vld [vmem:[%s3 + $0xe8] sm:$0xff]
    %v361 = vperm.slane %v352, 0
    %v362 = vmul.f32 %v361, %v359
    %v363 = vmul.f32 %v361, %v360
    %v364 = vsub.f32 %v357, %v362
    %v365 = vsub.f32 %v358, %v363
    %v366 = vld [vmem:[%s3 + $0xf0] sm:$0xff]
    %v367 = vld [vmem:[%s3 + $0xf8] sm:$0xff]
    %v368 = vadd.f32 %v364, %v366
    %v369 = vadd.f32 %v365, %v367
    %v370 = vld [vmem:[%s3 + $0x10] sm:$0xff]
    %v371 = vld [vmem:[%s3 + $0x18] sm:$0xff]
    %v372 = vperm.slane %v348, 0
    %v373 = vmul.f32 %v372, %v370
    %v374 = vmul.f32 %v372, %v371
    %v375 = vld [vmem:[%s3 + $0x20] sm:$0xff]
    %v376 = vld [vmem:[%s3 + $0x28] sm:$0xff]
    %v377 = vperm.slane %v347, 0
    %v378 = vmul.f32 %v377, %v375
    %v379 = vmul.f32 %v377, %v376
    %v380 = vsub.f32 %v373, %v378
    %v381 = vsub.f32 %v374, %v379
    %v382 = vld [vmem:[%s3 + $0x30] sm:$0xff]
    %v383 = vld [vmem:[%s3 + $0x38] sm:$0xff]
    %v384 = vadd.f32 %v380, %v382
    %v385 = vadd.f32 %v381, %v383
    %v386 = vsub.f32 %v368, %v384
    %v387 = vsub.f32 %v369, %v385
    %v388 = vperm.slane %v295, 0
    %v389 = vmul.f32 %v388, %v386
    %v390 = vmul.f32 %v388, %v387
    %v391 = vperm.slane %v339, 0
    %v392 = vmul.f32 %v391, %v386
    %v393 = vmul.f32 %v391, %v387
    %v394 = vperm.slane %v342, 0
    %v395 = vmul.f32 %v394, %v386
    %v396 = vmul.f32 %v394, %v387
    %v397 = vperm.slane %v351, 0
    %v398 = vmul.f32 %v397, %v359
    %v399 = vmul.f32 %v397, %v360
    %v400 = vld [vmem:[%s3 + $0xc0] sm:$0xff]
    %v401 = vld [vmem:[%s3 + $0xc8] sm:$0xff]
    %v402 = vmul.f32 %v356, %v400
    %v403 = vmul.f32 %v356, %v401
    %v404 = vsub.f32 %v398, %v402
    %v405 = vsub.f32 %v399, %v403
    %v406 = vld [vmem:[%s3 + $0x100] sm:$0xff]
    %v407 = vld [vmem:[%s3 + $0x108] sm:$0xff]
    %v408 = vadd.f32 %v404, %v406
    %v409 = vadd.f32 %v405, %v407
    %v410 = vperm.slane %v346, 0
    %v411 = vmul.f32 %v410, %v375
    %v412 = vmul.f32 %v410, %v376
    %v413 = vld [vmem:[%s3] sm:$0xff]
    %v414 = vld [vmem:[%s3 + $0x8] sm:$0xff]
    %v415 = vmul.f32 %v372, %v413
    %v416 = vmul.f32 %v372, %v414
    %v417 = vsub.f32 %v411, %v415
    %v418 = vsub.f32 %v412, %v416
    %v419 = vld [vmem:[%s3 + $0x40] sm:$0xff]
    %v420 = vld [vmem:[%s3 + $0x48] sm:$0xff]
    %v421 = vadd.f32 %v417, %v419
    %v422 = vadd.f32 %v418, %v420
    %v423 = vsub.f32 %v408, %v421
    %v424 = vsub.f32 %v409, %v422
    %v425 = vperm.slane %v296, 0
    %v426 = vmul.f32 %v425, %v423
    %v427 = vmul.f32 %v425, %v424
    %v428 = vadd.f32 %v389, %v426
    %v429 = vadd.f32 %v390, %v427
    %v430 = vperm.slane %v340, 0
    %v431 = vmul.f32 %v430, %v423
    %v432 = vmul.f32 %v430, %v424
    %v433 = vadd.f32 %v392, %v431
    %v434 = vadd.f32 %v393, %v432
    %v435 = vperm.slane %v343, 0
    %v436 = vmul.f32 %v435, %v423
    %v437 = vmul.f32 %v435, %v424
    %v438 = vadd.f32 %v395, %v436
    %v439 = vadd.f32 %v396, %v437
    %v440 = vmul.f32 %v361, %v400
    %v441 = vmul.f32 %v361, %v401
    %v442 = vmul.f32 %v397, %v354
    %v443 = vmul.f32 %v397, %v355
    %v444 = vsub.f32 %v440, %v442
    %v445 = vsub.f32 %v441, %v443
    %v446 = vld [vmem:[%s3 + $0x110] sm:$0xff]
    %v447 = vld [vmem:[%s3 + $0x118] sm:$0xff]
    %v448 = vadd.f32 %v444, %v446
    %v449 = vadd.f32 %v445, %v447
    %v450 = vmul.f32 %v377, %v413
    %v451 = vmul.f32 %v377, %v414
    %v452 = vmul.f32 %v410, %v370
    %v453 = vmul.f32 %v410, %v371
    %v454 = vsub.f32 %v450, %v452
    %v455 = vsub.f32 %v451, %v453
    %v456 = vld [vmem:[%s3 + $0x50] sm:$0xff]
    %v457 = vld [vmem:[%s3 + $0x58] sm:$0xff]
    %v458 = vadd.f32 %v454, %v456
    %v459 = vadd.f32 %v455, %v457
    %v460 = vsub.f32 %v448, %v458
    %v461 = vsub.f32 %v449, %v459
    %v462 = vperm.slane %v297, 0
    %v463 = vmul.f32 %v462, %v460
    %v464 = vmul.f32 %v462, %v461
    %v465 = vadd.f32 %v428, %v463
    %v466 = vadd.f32 %v429, %v464
    %v467 = vperm.slane %v341, 0
    %v468 = vmul.f32 %v467, %v460
    %v469 = vmul.f32 %v467, %v461
    %v470 = vadd.f32 %v433, %v468
    %v471 = vadd.f32 %v434, %v469
    %v472 = vperm.slane %v344, 0
    %v473 = vmul.f32 %v472, %v460
    %v474 = vmul.f32 %v472, %v461
    %v475 = vadd.f32 %v438, %v473
    %v476 = vadd.f32 %v439, %v474
    %477 = vst.msk [vmem:[%s4 + $0x10] sm:$0xff] %vm256, %v465
    %478 = vst.msk [vmem:[%s4 + $0x18] sm:$0xff] %vm256, %v466
    %479 = vst.msk [vmem:[%s4 + $0x50] sm:$0xff] %vm256, %v470
    %480 = vst.msk [vmem:[%s4 + $0x58] sm:$0xff] %vm256, %v471
    %481 = vst.msk [vmem:[%s4 + $0x60] sm:$0xff] %vm256, %v475
    %482 = vst.msk [vmem:[%s4 + $0x68] sm:$0xff] %vm256, %v476
    %s483 = sld [smem:[#allocation2 + $0x2]]
    %s484 = sld [smem:[#allocation4 + $0x1]]
    %s485 = sld [smem:[#allocation4 + $0x2]]
    %v486 = vld [vmem:[%s2 + $0x6] sm:$0x1]
    %v487 = vld [vmem:[%s2 + $0x3] sm:$0x1]
    %v488 = vsub.f32 %v486, %v487
    %v489 = vld [vmem:[%s2 + $0x7] sm:$0x1]
    %v490 = vld [vmem:[%s2 + $0x4] sm:$0x1]
    %v491 = vsub.f32 %v489, %v490
    %v492 = vld [vmem:[%s2 + $0x8] sm:$0x1]
    %v493 = vld [vmem:[%s2 + $0x5] sm:$0x1]
    %v494 = vsub.f32 %v492, %v493
    %v495 = vmul.f32 %v488, %v488
    %v496 = vmul.f32 %v491, %v491
    %v497 = vadd.f32 %v495, %v496
    %v498 = vmul.f32 %v494, %v494
    %v499 = vadd.f32 %v497, %v498
    %v500 = vadd.f32 %v499, 1e-12
    %v501 = vrsqrt.pop %v500
    %v502 = vmul.f32 %v501, %v500
    %v503 = vmul.f32 %v502, %v501
    %v504 = vmul.f32 0.5, %v503
    %v505 = vsub.f32 1.5, %v504
    %v506 = vmul.f32 %v501, %v505
    %vm507 = vweird.f32 %v500
    %vm508 = vweird.f32 %v501
    %vm509 = vmor %vm507, %vm508
    %v510 = vsel %vm509, %v501, %v506
    %v511 = vmul.f32 %v500, %v510
    %s512 = sadd.f32 %s484, %s485
    %v513 = vstv %s512
    %v514 = vsub.f32 %v511, %v513
    %v515 = vmul.f32 %v488, %v510
    %v516 = vmul.f32 %v491, %v510
    %v517 = vmul.f32 %v494, %v510
    %v518 = vand.u32 2147483647, %v515
    %vm519 = vcmp.lt.f32.partialorder %v518, 0.9
    %v520 = vsel %vm519, 1.0, 0.0
    %v521 = vsub.f32 1.0, %v520
    %v522 = vmul.f32 %v520, %v515
    %v523 = vmul.f32 %v521, %v516
    %v524 = vadd.f32 %v522, %v523
    %v525 = vmul.f32 %v524, %v515
    %v526 = vsub.f32 %v520, %v525
    %v527 = vmul.f32 %v524, %v516
    %v528 = vsub.f32 %v521, %v527
    %v529 = vsub.f32 0.0, %v524
    %v530 = vmul.f32 %v529, %v517
    %v531 = vmul.f32 %v526, %v526
    %v532 = vmul.f32 %v528, %v528
    %v533 = vadd.f32 %v531, %v532
    %v534 = vmul.f32 %v530, %v530
    %v535 = vadd.f32 %v533, %v534
    %v536 = vrsqrt.pop %v535
    %v537 = vmul.f32 %v536, %v535
    %v538 = vmul.f32 %v537, %v536
    %v539 = vmul.f32 0.5, %v538
    %v540 = vsub.f32 1.5, %v539
    %v541 = vmul.f32 %v536, %v540
    %vm542 = vweird.f32 %v535
    %vm543 = vweird.f32 %v536
    %vm544 = vmor %vm542, %vm543
    %v545 = vsel %vm544, %v536, %v541
    %v546 = vmul.f32 %v526, %v545
    %v547 = vmul.f32 %v528, %v545
    %v548 = vmul.f32 %v530, %v545
    %v549 = vmul.f32 %v516, %v548
    %v550 = vmul.f32 %v517, %v547
    %v551 = vsub.f32 %v549, %v550
    %v552 = vmul.f32 %v517, %v546
    %v553 = vmul.f32 %v515, %v548
    %v554 = vsub.f32 %v552, %v553
    %v555 = vmul.f32 %v515, %v547
    %v556 = vmul.f32 %v516, %v546
    %v557 = vsub.f32 %v555, %v556
    %v558 = vstv %s483
    %v559 = vmul.f32 %v558, %v546
    %v560 = vmul.f32 %v558, %v547
    %v561 = vmul.f32 %v558, %v548
    %v562 = vmul.f32 %v558, %v551
    %v563 = vmul.f32 %v558, %v554
    %v564 = vmul.f32 %v558, %v557
    %v565 = vstv %s484
    %v566 = vmul.f32 %v565, %v515
    %v567 = vmul.f32 %v565, %v516
    %v568 = vmul.f32 %v565, %v517
    %s569 = ssub.f32 0.0, %s485
    %v570 = vstv %s569
    %v571 = vmul.f32 %v570, %v515
    %v572 = vmul.f32 %v570, %v516
    %v573 = vmul.f32 %v570, %v517
    %v574 = vld [vmem:[%s3 + $0xd0] sm:$0xff]
    %v575 = vld [vmem:[%s3 + $0xd8] sm:$0xff]
    %v576 = vperm.slane %v573, 0
    %v577 = vmul.f32 %v576, %v574
    %v578 = vmul.f32 %v576, %v575
    %v579 = vld [vmem:[%s3 + $0xe0] sm:$0xff]
    %v580 = vld [vmem:[%s3 + $0xe8] sm:$0xff]
    %v581 = vperm.slane %v572, 0
    %v582 = vmul.f32 %v581, %v579
    %v583 = vmul.f32 %v581, %v580
    %v584 = vsub.f32 %v577, %v582
    %v585 = vsub.f32 %v578, %v583
    %v586 = vld [vmem:[%s3 + $0xf0] sm:$0xff]
    %v587 = vld [vmem:[%s3 + $0xf8] sm:$0xff]
    %v588 = vadd.f32 %v584, %v586
    %v589 = vadd.f32 %v585, %v587
    %v590 = vld [vmem:[%s3 + $0x70] sm:$0xff]
    %v591 = vld [vmem:[%s3 + $0x78] sm:$0xff]
    %v592 = vperm.slane %v568, 0
    %v593 = vmul.f32 %v592, %v590
    %v594 = vmul.f32 %v592, %v591
    %v595 = vld [vmem:[%s3 + $0x80] sm:$0xff]
    %v596 = vld [vmem:[%s3 + $0x88] sm:$0xff]
    %v597 = vperm.slane %v567, 0
    %v598 = vmul.f32 %v597, %v595
    %v599 = vmul.f32 %v597, %v596
    %v600 = vsub.f32 %v593, %v598
    %v601 = vsub.f32 %v594, %v599
    %v602 = vld [vmem:[%s3 + $0x90] sm:$0xff]
    %v603 = vld [vmem:[%s3 + $0x98] sm:$0xff]
    %v604 = vadd.f32 %v600, %v602
    %v605 = vadd.f32 %v601, %v603
    %v606 = vsub.f32 %v588, %v604
    %v607 = vsub.f32 %v589, %v605
    %v608 = vperm.slane %v515, 0
    %v609 = vmul.f32 %v608, %v606
    %v610 = vmul.f32 %v608, %v607
    %v611 = vperm.slane %v559, 0
    %v612 = vmul.f32 %v611, %v606
    %v613 = vmul.f32 %v611, %v607
    %v614 = vperm.slane %v562, 0
    %v615 = vmul.f32 %v614, %v606
    %v616 = vmul.f32 %v614, %v607
    %v617 = vperm.slane %v571, 0
    %v618 = vmul.f32 %v617, %v579
    %v619 = vmul.f32 %v617, %v580
    %v620 = vld [vmem:[%s3 + $0xc0] sm:$0xff]
    %v621 = vld [vmem:[%s3 + $0xc8] sm:$0xff]
    %v622 = vmul.f32 %v576, %v620
    %v623 = vmul.f32 %v576, %v621
    %v624 = vsub.f32 %v618, %v622
    %v625 = vsub.f32 %v619, %v623
    %v626 = vld [vmem:[%s3 + $0x100] sm:$0xff]
    %v627 = vld [vmem:[%s3 + $0x108] sm:$0xff]
    %v628 = vadd.f32 %v624, %v626
    %v629 = vadd.f32 %v625, %v627
    %v630 = vperm.slane %v566, 0
    %v631 = vmul.f32 %v630, %v595
    %v632 = vmul.f32 %v630, %v596
    %v633 = vld [vmem:[%s3 + $0x60] sm:$0xff]
    %v634 = vld [vmem:[%s3 + $0x68] sm:$0xff]
    %v635 = vmul.f32 %v592, %v633
    %v636 = vmul.f32 %v592, %v634
    %v637 = vsub.f32 %v631, %v635
    %v638 = vsub.f32 %v632, %v636
    %v639 = vld [vmem:[%s3 + $0xa0] sm:$0xff]
    %v640 = vld [vmem:[%s3 + $0xa8] sm:$0xff]
    %v641 = vadd.f32 %v637, %v639
    %v642 = vadd.f32 %v638, %v640
    %v643 = vsub.f32 %v628, %v641
    %v644 = vsub.f32 %v629, %v642
    %v645 = vperm.slane %v516, 0
    %v646 = vmul.f32 %v645, %v643
    %v647 = vmul.f32 %v645, %v644
    %v648 = vadd.f32 %v609, %v646
    %v649 = vadd.f32 %v610, %v647
    %v650 = vperm.slane %v560, 0
    %v651 = vmul.f32 %v650, %v643
    %v652 = vmul.f32 %v650, %v644
    %v653 = vadd.f32 %v612, %v651
    %v654 = vadd.f32 %v613, %v652
    %v655 = vperm.slane %v563, 0
    %v656 = vmul.f32 %v655, %v643
    %v657 = vmul.f32 %v655, %v644
    %v658 = vadd.f32 %v615, %v656
    %v659 = vadd.f32 %v616, %v657
    %v660 = vmul.f32 %v581, %v620
    %v661 = vmul.f32 %v581, %v621
    %v662 = vmul.f32 %v617, %v574
    %v663 = vmul.f32 %v617, %v575
    %v664 = vsub.f32 %v660, %v662
    %v665 = vsub.f32 %v661, %v663
    %v666 = vld [vmem:[%s3 + $0x110] sm:$0xff]
    %v667 = vld [vmem:[%s3 + $0x118] sm:$0xff]
    %v668 = vadd.f32 %v664, %v666
    %v669 = vadd.f32 %v665, %v667
    %v670 = vmul.f32 %v597, %v633
    %v671 = vmul.f32 %v597, %v634
    %v672 = vmul.f32 %v630, %v590
    %v673 = vmul.f32 %v630, %v591
    %v674 = vsub.f32 %v670, %v672
    %v675 = vsub.f32 %v671, %v673
    %v676 = vld [vmem:[%s3 + $0xb0] sm:$0xff]
    %v677 = vld [vmem:[%s3 + $0xb8] sm:$0xff]
    %v678 = vadd.f32 %v674, %v676
    %v679 = vadd.f32 %v675, %v677
    %v680 = vsub.f32 %v668, %v678
    %v681 = vsub.f32 %v669, %v679
    %v682 = vperm.slane %v517, 0
    %v683 = vmul.f32 %v682, %v680
    %v684 = vmul.f32 %v682, %v681
    %v685 = vadd.f32 %v648, %v683
    %v686 = vadd.f32 %v649, %v684
    %v687 = vperm.slane %v561, 0
    %v688 = vmul.f32 %v687, %v680
    %v689 = vmul.f32 %v687, %v681
    %v690 = vadd.f32 %v653, %v688
    %v691 = vadd.f32 %v654, %v689
    %v692 = vperm.slane %v564, 0
    %v693 = vmul.f32 %v692, %v680
    %v694 = vmul.f32 %v692, %v681
    %v695 = vadd.f32 %v658, %v693
    %v696 = vadd.f32 %v659, %v694
    %697 = vst.msk [vmem:[%s4 + $0x20] sm:$0xff] %vm256, %v685
    %698 = vst.msk [vmem:[%s4 + $0x28] sm:$0xff] %vm256, %v686
    %699 = vst.msk [vmem:[%s4 + $0x70] sm:$0xff] %vm256, %v690
    %700 = vst.msk [vmem:[%s4 + $0x78] sm:$0xff] %vm256, %v691
    %701 = vst.msk [vmem:[%s4 + $0x80] sm:$0xff] %vm256, %v695
    %702 = vst.msk [vmem:[%s4 + $0x88] sm:$0xff] %vm256, %v696
    %v704 = vrot.slane %v294, 7
    %v707 = vrot.slane %v514, 6
    %vm709 = vcmask 1040384
    %v710 = vsel %vm709, %v73, %v704
    %vm711 = vcmask 1041408
    %v712 = vsel %vm711, %v710, %v707
    %vm713 = vcmask 124928
    %714 = vst.msk [vmem:[%s4 + $0x90] sm:$0x7] %vm713, %v712
    // Predicated region
    $region26: #{contact_terms_forward.1} parent=1 // pred_check
      _
    $region27: #{contact_terms_forward.1} parent=1 // pred_check_branch
      %716 = sbr.rel (0) target = $region29
    $region28: #{contact_terms_forward.1} parent=1 // pred_region
      _
    $region29: #{contact_terms_forward.1} parent=1 // pred_fallthru
      _
    // Predicated region
    $region30: #{contact_terms_forward.1} parent=1 // pred_check
      _
    $region31: #{contact_terms_forward.1} parent=1 // pred_check_branch
      %718 = sbr.rel (0) target = $region33
    $region32: #{contact_terms_forward.1} parent=1 // pred_region
      _
    $region33: #{contact_terms_forward.1} parent=1 // pred_fallthru
      _
    %719 = vsyncpa [#allocation3], 1
    %720 = vsyncpa [#allocation5], 1

</llo_original>
